<compile_context>
chip_gen: v7x
topology: tpu7x:2x2x1
jax: 0.10.0
libtpu: 0.0.40
codegen_flags: <defaults>
</compile_context>

<pallas_src>
import functools

import jax
import jax.numpy as jnp
from jax.experimental import pallas as pl
from jax.experimental.pallas import tpu as pltpu


NEG_SLOPE = 0.01          # torch.nn.LeakyReLU default
H1, H2 = 512, 1024
LANE = 128


def _lrelu(x):
    return jnp.where(x > 0, x, NEG_SLOPE * x)


def _round_up(x, m):
    return (x + m - 1) // m * m


def _mlp_deformer_kernel(code_ref, w1_ref, b1_ref, w2_ref, b2_ref,
                         w3_ref, b3_ref, *refs, residual):
    if residual:
        tpl_ref, out_ref, h2_ref = refs
    else:
        out_ref, h2_ref = refs

    # Layers 1-2: computed exactly once (first grid step) into VMEM scratch.
    # Their operands have constant index_maps, so they are DMA'd exactly once.
    @pl.when(pl.program_id(0) == 0)
    def _():
        w1 = w1_ref[...]
        x = code_ref[...].astype(w1.dtype)
        h1 = jnp.dot(x, w1, preferred_element_type=jnp.float32)
        h1 = _lrelu(h1 + b1_ref[...])                      # (B, 512) f32
        w2 = w2_ref[...]
        h2 = jnp.dot(h1.astype(w2.dtype), w2,
                     preferred_element_type=jnp.float32)
        h2_ref[...] = _lrelu(h2 + b2_ref[...])             # (B, 1024) f32

    # Per-step: one column tile of layer 3 (w3 streamed from HBM,
    # double-buffered by the Pallas pipeline).
    w3 = w3_ref[...]                                       # (1024, TN)
    y = jnp.dot(h2_ref[...].astype(w3.dtype), w3,
                preferred_element_type=jnp.float32)
    y = y + b3_ref[...]                                    # (B, TN) f32
    if residual:
        y = y + tpl_ref[...]
    out_ref[...] = y


def mlp_deformer_forward(code, template, params, *, residual=True,
                         col_tile=512, weight_dtype=jnp.bfloat16):
    """code: (B, bottleneck) or (B, ...); template: (B, C, N).

    params = (w1, b1, w2, b2, w3, b3) with weights stored as (in, out)
    (i.e. transposed vs. torch's (out, in)).
    """
    B, C, N = template.shape
    if code.ndim > 2:
        code = code.reshape(B, -1)
    code = code.astype(jnp.float32)
    cin = code.shape[1]

    w1, b1, w2, b2, w3, b3 = params
    P = C * N
    assert w1.shape == (cin, H1) and w2.shape == (H1, H2) and w3.shape == (H2, P)

    wdt = jnp.dtype(weight_dtype)
    w1 = w1.astype(wdt)
    w2 = w2.astype(wdt)
    w3 = w3.astype(wdt)
    b1 = b1.reshape(1, H1).astype(jnp.float32)
    b2 = b2.reshape(1, H2).astype(jnp.float32)
    b3 = b3.reshape(1, P).astype(jnp.float32)

    # Lane-dense, (8,128)-aligned column tiling of the (1024, C*N) slab.
    tn = max(LANE, (min(col_tile, _round_up(P, LANE)) // LANE) * LANE)
    p_pad = _round_up(P, tn)
    pad = p_pad - P
    if pad:
        w3 = jnp.pad(w3, ((0, 0), (0, pad)))
        b3 = jnp.pad(b3, ((0, 0), (0, pad)))
    n_tiles = p_pad // tn

    const = lambda shape: pl.BlockSpec(shape, lambda j, _s=len(shape): (0,) * _s)

    inputs = [code, w1, b1, w2, b2, w3, b3]
    in_specs = [
        const(code.shape),
        const(w1.shape), const(b1.shape),
        const(w2.shape), const(b2.shape),
        pl.BlockSpec((H2, tn), lambda j: (0, j)),   # w3 column tile (streamed)
        pl.BlockSpec((1, tn), lambda j: (0, j)),    # b3 tile
    ]
    if residual:
        tpl_flat = template.reshape(B, P).astype(jnp.float32)
        if pad:
            tpl_flat = jnp.pad(tpl_flat, ((0, 0), (0, pad)))
        inputs.append(tpl_flat)
        in_specs.append(pl.BlockSpec((B, tn), lambda j: (0, j)))

    # Right-size scoped VMEM to the working set (double-buffered tiles),
    # capped comfortably below v7x's 64 MiB physical VMEM.
    wbytes = wdt.itemsize
    est = (2 * (code.size * 4 + w1.size * wbytes + b1.size * 4
                + w2.size * wbytes + b2.size * 4)          # resident inputs
           + 2 * (H2 * tn * wbytes + tn * 4 + B * tn * 4
                  + (B * tn * 4 if residual else 0))       # streamed tiles
           + B * H2 * 4)                                   # h2 scratch
    vmem_limit = int(min(48 << 20, max(16 << 20, est + (8 << 20))))

    out_flat = pl.pallas_call(
        functools.partial(_mlp_deformer_kernel, residual=residual),
        out_shape=jax.ShapeDtypeStruct((B, p_pad), jnp.float32),
        grid=(n_tiles,),
        in_specs=in_specs,
        out_specs=pl.BlockSpec((B, tn), lambda j: (0, j)),
        scratch_shapes=[pltpu.VMEM((B, H2), jnp.float32)],
        compiler_params=pltpu.CompilerParams(
            # "arbitrary": step 0 fills the h2 scratch that all later steps
            # read, so this axis must not be split across TensorCores.
            dimension_semantics=("arbitrary",),
            vmem_limit_bytes=vmem_limit,
        ),
    )(*inputs)

    out = out_flat[:, :P] if pad else out_flat
    return out.reshape(B, C, N)


def init_params(key, bottleneck, npoint, dim):
    """Deterministic synthetic init; weights stored as (in, out), f32."""
    out_dim = npoint * dim
    dims = [(bottleneck, H1), (H1, H2), (H2, out_dim)]
    params = []
    for i, (fan_in, fan_out) in enumerate(dims):
        kw, kb = jax.random.split(jax.random.fold_in(key, i))
        scale = 1.0 / jnp.sqrt(jnp.float32(fan_in))
        w = jax.random.uniform(kw, (fan_in, fan_out), jnp.float32,
                               minval=-scale, maxval=scale)
        b = jax.random.uniform(kb, (1, fan_out), jnp.float32,
                               minval=-scale, maxval=scale)
        params += [w, b]
    return tuple(params)


def reference_forward(code, template, params, *, residual=True,
                      weight_dtype=jnp.float32):
    """Pure-JAX reference mirroring the torch module (same dtype discipline)."""
    B, C, N = template.shape
    if code.ndim > 2:
        code = code.reshape(B, -1)
    code = code.astype(jnp.float32)
    w1, b1, w2, b2, w3, b3 = params
    wdt = jnp.dtype(weight_dtype)

    def dense(x, w, b):
        return jnp.dot(x.astype(wdt), w.astype(wdt),
                       preferred_element_type=jnp.float32) + b.reshape(1, -1)

    x = _lrelu(dense(code, w1, b1))
    x = _lrelu(dense(x, w2, b2))
    x = dense(x, w3, b3).reshape(B, C, N)
    if residual:
        x = x + template.astype(jnp.float32)
    return x


if __name__ == "__main__":
    key = jax.random.PRNGKey(0)

    # --- Test 1: f32 weights, residual path, non-lane-aligned C*N (120->128) ---
    B, dim, npoint, bottleneck = 2, 3, 40, 32
    k_code, k_tpl, k_par = jax.random.split(key, 3)
    code = jax.random.normal(k_code, (B, bottleneck), jnp.float32)
    template = jax.random.normal(k_tpl, (B, dim, npoint), jnp.float32)
    params = init_params(k_par, bottleneck, npoint, dim)

    out = mlp_deformer_forward(code, template, params, residual=True,
                               weight_dtype=jnp.float32)
    out = jax.block_until_ready(out)
    ref = reference_forward(code, template, params, residual=True,
                            weight_dtype=jnp.float32)
    assert out.shape == (B, dim, npoint)
    assert jnp.allclose(out, ref, atol=2e-3, rtol=2e-3), "f32 mismatch vs reference"

    # --- Test 2: bf16 weights (production default), multi-tile grid, no residual ---
    B2, dim2, npoint2 = 2, 4, 96                  # C*N = 384 -> 3 column tiles of 128
    code2 = jax.random.normal(jax.random.fold_in(key, 1), (B2, bottleneck), jnp.float32)
    template2 = jax.random.normal(jax.random.fold_in(key, 2), (B2, dim2, npoint2),
                                  jnp.float32)
    params2 = init_params(jax.random.fold_in(key, 3), bottleneck, npoint2, dim2)

    out2 = mlp_deformer_forward(code2, template2, params2, residual=False,
                                col_tile=128, weight_dtype=jnp.bfloat16)
    out2 = jax.block_until_ready(out2)
    ref2 = reference_forward(code2, template2, params2, residual=False,
                             weight_dtype=jnp.bfloat16)
    assert out2.shape == (B2, dim2, npoint2)
    assert jnp.allclose(out2, ref2, atol=5e-2, rtol=5e-2), "bf16 mismatch vs reference"

    print("KERNEL_OK")
</pallas_src>

<mosaic_0001>
module attributes {stable_mosaic.version = 11 : i64} {
  func.func @_mlp_deformer_kernel(%arg0: i32, %arg1: memref<2x32xf32, #tpu.memory_space<vmem>>, %arg2: memref<32x512xf32, #tpu.memory_space<vmem>>, %arg3: memref<1x512xf32, #tpu.memory_space<vmem>>, %arg4: memref<512x1024xf32, #tpu.memory_space<vmem>>, %arg5: memref<1x1024xf32, #tpu.memory_space<vmem>>, %arg6: memref<1024x128xf32, #tpu.memory_space<vmem>>, %arg7: memref<1x128xf32, #tpu.memory_space<vmem>>, %arg8: memref<2x128xf32, #tpu.memory_space<vmem>>, %arg9: memref<2x128xf32, #tpu.memory_space<vmem>>, %arg10: memref<2x1024xf32, #tpu.memory_space<vmem>>) attributes {dimension_semantics = [#tpu.dimension_semantics<arbitrary>], iteration_bounds = array<i64: 1>, scalar_prefetch = 0 : i64, scratch_operands = 1 : i64, tpu.core_type = #tpu.core_type<tc>, window_params = [{pipeline_mode = #tpu.pipeline_mode<synchronous>, transform_indices = @transform_0, window_bounds = array<i64: 2, 32>}, {pipeline_mode = #tpu.pipeline_mode<synchronous>, transform_indices = @transform_1, window_bounds = array<i64: 32, 512>}, {pipeline_mode = #tpu.pipeline_mode<synchronous>, transform_indices = @transform_2, window_bounds = array<i64: 1, 512>}, {pipeline_mode = #tpu.pipeline_mode<synchronous>, transform_indices = @transform_3, window_bounds = array<i64: 512, 1024>}, {pipeline_mode = #tpu.pipeline_mode<synchronous>, transform_indices = @transform_4, window_bounds = array<i64: 1, 1024>}, {transform_indices = @transform_5, window_bounds = array<i64: 1024, 128>}, {transform_indices = @transform_6, window_bounds = array<i64: 1, 128>}, {transform_indices = @transform_7, window_bounds = array<i64: 2, 128>}, {transform_indices = @transform_8, window_bounds = array<i64: 2, 128>}]} {
    %c0_i32 = arith.constant 0 : i32
    %0 = arith.cmpi eq, %arg0, %c0_i32 : i32
    %1 = arith.extui %0 : i1 to i32
    %c0_i32_0 = arith.constant 0 : i32
    %2 = arith.cmpi ne, %1, %c0_i32_0 : i32
    scf.if %2 {
      %c0_10 = arith.constant 0 : index
      %c0_11 = arith.constant 0 : index
      %12 = vector.load %arg2[%c0_10, %c0_11] : memref<32x512xf32, #tpu.memory_space<vmem>>, vector<32x512xf32>
      %c0_12 = arith.constant 0 : index
      %c0_13 = arith.constant 0 : index
      %13 = vector.load %arg1[%c0_12, %c0_13] : memref<2x32xf32, #tpu.memory_space<vmem>>, vector<2x32xf32>
      %cst_14 = arith.constant dense<0.000000e+00> : vector<2x512xf32>
      %14 = tpu.matmul %13, %12, %cst_14 {dimension_numbers = #tpu.dot_dimension_numbers<[1], [0], [0], [1], [0, 0, 1, 1], [], []>} : vector<2x32xf32>, vector<32x512xf32>, vector<2x512xf32> -> vector<2x512xf32>
      %c0_15 = arith.constant 0 : index
      %c0_16 = arith.constant 0 : index
      %15 = vector.load %arg3[%c0_15, %c0_16] : memref<1x512xf32, #tpu.memory_space<vmem>>, vector<1x512xf32>
      %16 = vector.broadcast %15 : vector<1x512xf32> to vector<2x512xf32>
      %17 = arith.addf %14, %16 : vector<2x512xf32>
      %cst_17 = arith.constant 0.000000e+00 : f32
      %18 = vector.broadcast %cst_17 : f32 to vector<2x512xf32>
      %19 = arith.cmpf ogt, %17, %18 : vector<2x512xf32>
      %cst_18 = arith.constant 0.00999999977 : f32
      %20 = vector.broadcast %cst_18 : f32 to vector<2x512xf32>
      %21 = arith.mulf %20, %17 : vector<2x512xf32>
      %22 = arith.select %19, %17, %21 : vector<2x512xi1>, vector<2x512xf32>
      %c0_19 = arith.constant 0 : index
      %c0_20 = arith.constant 0 : index
      %23 = vector.load %arg4[%c0_19, %c0_20] : memref<512x1024xf32, #tpu.memory_space<vmem>>, vector<512x1024xf32>
      %cst_21 = arith.constant dense<0.000000e+00> : vector<2x1024xf32>
      %24 = tpu.matmul %22, %23, %cst_21 {dimension_numbers = #tpu.dot_dimension_numbers<[1], [0], [0], [1], [0, 0, 1, 1], [], []>} : vector<2x512xf32>, vector<512x1024xf32>, vector<2x1024xf32> -> vector<2x1024xf32>
      %c0_22 = arith.constant 0 : index
      %c0_23 = arith.constant 0 : index
      %25 = vector.load %arg5[%c0_22, %c0_23] : memref<1x1024xf32, #tpu.memory_space<vmem>>, vector<1x1024xf32>
      %26 = vector.broadcast %25 : vector<1x1024xf32> to vector<2x1024xf32>
      %27 = arith.addf %24, %26 : vector<2x1024xf32>
      %cst_24 = arith.constant 0.000000e+00 : f32
      %28 = vector.broadcast %cst_24 : f32 to vector<2x1024xf32>
      %29 = arith.cmpf ogt, %27, %28 : vector<2x1024xf32>
      %cst_25 = arith.constant 0.00999999977 : f32
      %30 = vector.broadcast %cst_25 : f32 to vector<2x1024xf32>
      %31 = arith.mulf %30, %27 : vector<2x1024xf32>
      %32 = arith.select %29, %27, %31 : vector<2x1024xi1>, vector<2x1024xf32>
      %c0_26 = arith.constant 0 : index
      %c0_27 = arith.constant 0 : index
      %33 = vector.load %arg10[%c0_26, %c0_27] : memref<2x1024xf32, #tpu.memory_space<vmem>>, vector<2x1024xf32>
      tpu.vector_store %arg10[%c0_26, %c0_27], %32 {strides = array<i32>} : memref<2x1024xf32, #tpu.memory_space<vmem>>, vector<2x1024xf32>,
    } else {
    }
    %c0 = arith.constant 0 : index
    %c0_1 = arith.constant 0 : index
    %3 = vector.load %arg6[%c0, %c0_1] : memref<1024x128xf32, #tpu.memory_space<vmem>>, vector<1024x128xf32>
    %c0_2 = arith.constant 0 : index
    %c0_3 = arith.constant 0 : index
    %4 = vector.load %arg10[%c0_2, %c0_3] : memref<2x1024xf32, #tpu.memory_space<vmem>>, vector<2x1024xf32>
    %cst = arith.constant dense<0.000000e+00> : vector<2x128xf32>
    %5 = tpu.matmul %4, %3, %cst {dimension_numbers = #tpu.dot_dimension_numbers<[1], [0], [0], [1], [0, 0, 1, 1], [], []>} : vector<2x1024xf32>, vector<1024x128xf32>, vector<2x128xf32> -> vector<2x128xf32>
    %c0_4 = arith.constant 0 : index
    %c0_5 = arith.constant 0 : index
    %6 = vector.load %arg7[%c0_4, %c0_5] : memref<1x128xf32, #tpu.memory_space<vmem>>, vector<1x128xf32>
    %7 = vector.broadcast %6 : vector<1x128xf32> to vector<2x128xf32>
    %8 = arith.addf %5, %7 : vector<2x128xf32>
    %c0_6 = arith.constant 0 : index
    %c0_7 = arith.constant 0 : index
    %9 = vector.load %arg8[%c0_6, %c0_7] : memref<2x128xf32, #tpu.memory_space<vmem>>, vector<2x128xf32>
    %10 = arith.addf %8, %9 : vector<2x128xf32>
    %c0_8 = arith.constant 0 : index
    %c0_9 = arith.constant 0 : index
    %11 = vector.load %arg9[%c0_8, %c0_9] : memref<2x128xf32, #tpu.memory_space<vmem>>, vector<2x128xf32>
    tpu.vector_store %arg9[%c0_8, %c0_9], %10 {strides = array<i32>} : memref<2x128xf32, #tpu.memory_space<vmem>>, vector<2x128xf32>,
    return
  }
  func.func @transform_0(%arg0: i32) -> (i32, i32) {
    %c0_i32 = arith.constant 0 : i32
    %c0_i32_0 = arith.constant 0 : i32
    %c0_i32_1 = arith.constant 0 : i32
    return %c0_i32, %c0_i32_0 : i32, i32
  }
  func.func @transform_1(%arg0: i32) -> (i32, i32) {
    %c0_i32 = arith.constant 0 : i32
    %c0_i32_0 = arith.constant 0 : i32
    %c0_i32_1 = arith.constant 0 : i32
    return %c0_i32, %c0_i32_0 : i32, i32
  }
  func.func @transform_2(%arg0: i32) -> (i32, i32) {
    %c0_i32 = arith.constant 0 : i32
    %c0_i32_0 = arith.constant 0 : i32
    %c0_i32_1 = arith.constant 0 : i32
    return %c0_i32, %c0_i32_0 : i32, i32
  }
  func.func @transform_3(%arg0: i32) -> (i32, i32) {
    %c0_i32 = arith.constant 0 : i32
    %c0_i32_0 = arith.constant 0 : i32
    %c0_i32_1 = arith.constant 0 : i32
    return %c0_i32, %c0_i32_0 : i32, i32
  }
  func.func @transform_4(%arg0: i32) -> (i32, i32) {
    %c0_i32 = arith.constant 0 : i32
    %c0_i32_0 = arith.constant 0 : i32
    %c0_i32_1 = arith.constant 0 : i32
    return %c0_i32, %c0_i32_0 : i32, i32
  }
  func.func @transform_5(%arg0: i32) -> (i32, i32) {
    %c0_i32 = arith.constant 0 : i32
    %c0_i32_0 = arith.constant 0 : i32
    return %c0_i32, %arg0 : i32, i32
  }
  func.func @transform_6(%arg0: i32) -> (i32, i32) {
    %c0_i32 = arith.constant 0 : i32
    %c0_i32_0 = arith.constant 0 : i32
    return %c0_i32, %arg0 : i32, i32
  }
  func.func @transform_7(%arg0: i32) -> (i32, i32) {
    %c0_i32 = arith.constant 0 : i32
    %c0_i32_0 = arith.constant 0 : i32
    return %c0_i32, %arg0 : i32, i32
  }
  func.func @transform_8(%arg0: i32) -> (i32, i32) {
    %c0_i32 = arith.constant 0 : i32
    %c0_i32_0 = arith.constant 0 : i32
    return %c0_i32, %arg0 : i32, i32
  }
}

</mosaic_0001>

<llo_original>
// kernel: tpu_custom_call.1
$region0: #{tpu_custom_call.1}
  #allocation0 [shape = 'u32[]', space=smem, size = 0x4, offset = 0x4, fixed_abs, tag = 'smem constant byte address 0x4 - core index']
  #allocation1 [shape = 'u32[144,128]{1,0:T(1,128)}', space=vmem, size = 0x12000, scoped, tag = 'internal scratch']
  #allocation2 [shape = 'f32[2,1024]{1,0:T(2,128)}', space=vmem, size = 0x2000, scoped, tag = 'scratch operand']
  %s0 = inlined_call_operand.hbm [shape: f32[2,32], index: 0, kind: input, shape index: {}]
  %s1 = inlined_call_operand.hbm [shape: f32[32,512], index: 1, kind: input, shape index: {}]
  %s2 = inlined_call_operand.hbm [shape: f32[1,512], index: 2, kind: input, shape index: {}]
  %s3 = inlined_call_operand.hbm [shape: f32[512,1024], index: 3, kind: input, shape index: {}]
  %s4 = inlined_call_operand.hbm [shape: f32[1,1024], index: 4, kind: input, shape index: {}]
  %s5 = inlined_call_operand.hbm [shape: f32[1024,128], index: 5, kind: input, shape index: {}]
  %s6 = inlined_call_operand.hbm [shape: f32[1,128], index: 6, kind: input, shape index: {}]
  %s7 = inlined_call_operand.hbm [shape: f32[2,128], index: 7, kind: input, shape index: {}]
  %s8 = inlined_call_operand.hbm [shape: f32[2,128], index: 8, kind: output, shape index: {}]
  %s9 = sld [smem:[#allocation0]]
  $region78: #{tpu_custom_call.1} parent=0
    _
  %s11 = ssub.s32 1, %s9
  %s12 = scalar_select 0, %s11, %s9
  $region1: #{tpu_custom_call.1} parent=0
    #allocation3 [shape = 'u8[1024]{0}', space=vmem, size = 0x400, scoped, tag = 'input window, operand 0, single buffered']
    #allocation4 [shape = 's32[1]{0}', space=sflag, size = 0x4, scoped, tag = 'scoped memory for tpu_custom_call.1']
    #allocation5 [shape = 's32[1]{0}', space=sflag, size = 0x4, scoped, tag = 'scoped memory for tpu_custom_call.1']
    #allocation6 [shape = 'u8[65536]{0}', space=vmem, size = 0x10000, scoped, tag = 'input window, operand 1, single buffered']
    #allocation7 [shape = 's32[1]{0}', space=sflag, size = 0x4, scoped, tag = 'scoped memory for tpu_custom_call.1']
    #allocation8 [shape = 'u8[2048]{0}', space=vmem, size = 0x800, scoped, tag = 'input window, operand 2, single buffered']
    #allocation9 [shape = 'u8[2097152]{0}', space=vmem, size = 0x200000, scoped, tag = 'input window, operand 3, single buffered']
    #allocation10 [shape = 's32[1]{0}', space=sflag, size = 0x4, scoped, tag = 'scoped memory for tpu_custom_call.1']
    #allocation11 [shape = 'u8[4096]{0}', space=vmem, size = 0x1000, scoped, tag = 'input window, operand 4, single buffered']
    #allocation12 [shape = 'u8[524288]{0}', space=vmem, size = 0x80000, scoped, tag = 'input window, operand 5, single buffered']
    #allocation13 [shape = 's32[1]{0}', space=sflag, size = 0x4, scoped, tag = 'scoped memory for tpu_custom_call.1']
    #allocation14 [shape = 'u8[512]{0}', space=vmem, size = 0x400, scoped, tag = 'input window, operand 6, single buffered']
    #allocation15 [shape = 'u8[1024]{0}', space=vmem, size = 0x400, scoped, tag = 'input window, operand 7, single buffered']
    #allocation16 [shape = 's32[1]{0}', space=sflag, size = 0x4, scoped, tag = 'scoped memory for tpu_custom_call.1']
    #allocation17 [shape = 'u8[1024]{0}', space=vmem, size = 0x400, scoped, tag = 'output window, operand 0, single buffered']
    %13 = vsyncpa [#allocation4], 0
    %14 = vsyncpa [#allocation7], 0
    %15 = vsyncpa [#allocation10], 0
    %16 = vsyncpa [#allocation13], 0
    %17 = vsyncpa [#allocation16], 0
    %18 = vsyncpa [#allocation5], 0
    // Predicated region
    $region2: #{tpu_custom_call.1} parent=1 // pred_check
      _
    $region3: #{tpu_custom_call.1} parent=1 // pred_check_branch
      %20 = sbr.rel (0) target = $region5
    $region4: #{tpu_custom_call.1} parent=1 // pred_region
      %s22 = ssub.s32 32, 32
      %23 = vsyncadd [#allocation4], %s22
      %s25 = sshll.u32 [#allocation3], 4
      %s26 = int_to_ptr.vmem [resolvable:$true] %s25
      %28 = dma.hbm_to_vmem [thread:$0]  %s0, 32, %s26, [#allocation4]
    $region5: #{tpu_custom_call.1} parent=1 // pred_fallthru
      _
    // Predicated region
    $region6: #{tpu_custom_call.1} parent=1 // pred_check
      _
    $region7: #{tpu_custom_call.1} parent=1 // pred_check_branch
      %30 = sbr.rel (0) target = $region9
    $region8: #{tpu_custom_call.1} parent=1 // pred_region
      %s32 = ssub.s32 2048, 2048
      %33 = vsyncadd [#allocation7], %s32
      %s34 = sshll.u32 [#allocation6], 4
      %s35 = int_to_ptr.vmem [resolvable:$true] %s34
      %40 = dma.hbm_to_vmem [thread:$0]  %s1, 2048, %s35, [#allocation7], 512, 512, 32
    $region9: #{tpu_custom_call.1} parent=1 // pred_fallthru
      _
    // Predicated region
    $region10: #{tpu_custom_call.1} parent=1 // pred_check
      _
    $region11: #{tpu_custom_call.1} parent=1 // pred_check_branch
      %42 = sbr.rel (0) target = $region13
    $region12: #{tpu_custom_call.1} parent=1 // pred_region
      %s44 = ssub.s32 64, 64
      %45 = vsyncadd [#allocation7], %s44
      %s47 = sshll.u32 [#allocation8], 4
      %s48 = int_to_ptr.vmem [resolvable:$true] %s47
      %50 = dma.hbm_to_vmem [thread:$0]  %s2, 64, %s48, [#allocation7]
    $region13: #{tpu_custom_call.1} parent=1 // pred_fallthru
      _
    // Predicated region
    $region14: #{tpu_custom_call.1} parent=1 // pred_check
      _
    $region15: #{tpu_custom_call.1} parent=1 // pred_check_branch
      %52 = sbr.rel (0) target = $region17
    $region16: #{tpu_custom_call.1} parent=1 // pred_region
      %s54 = ssub.s32 65536, 65536
      %55 = vsyncadd [#allocation10], %s54
      %s56 = sshll.u32 [#allocation9], 4
      %s57 = int_to_ptr.vmem [resolvable:$true] %s56
      %62 = dma.hbm_to_vmem [thread:$0]  %s3, 65536, %s57, [#allocation10], 1024, 1024, 64
    $region17: #{tpu_custom_call.1} parent=1 // pred_fallthru
      _
    // Predicated region
    $region18: #{tpu_custom_call.1} parent=1 // pred_check
      _
    $region19: #{tpu_custom_call.1} parent=1 // pred_check_branch
      %64 = sbr.rel (0) target = $region21
    $region20: #{tpu_custom_call.1} parent=1 // pred_region
      %s66 = ssub.s32 128, 128
      %67 = vsyncadd [#allocation10], %s66
      %s69 = sshll.u32 [#allocation11], 4
      %s70 = int_to_ptr.vmem [resolvable:$true] %s69
      %72 = dma.hbm_to_vmem [thread:$0]  %s4, 128, %s70, [#allocation10]
    $region21: #{tpu_custom_call.1} parent=1 // pred_fallthru
      _
    // Predicated region
    $region22: #{tpu_custom_call.1} parent=1 // pred_check
      _
    $region23: #{tpu_custom_call.1} parent=1 // pred_check_branch
      %74 = sbr.rel (0) target = $region25
    $region24: #{tpu_custom_call.1} parent=1 // pred_region
      %s76 = ssub.s32 16384, 16384
      %77 = vsyncadd [#allocation13], %s76
      %s78 = sshll.u32 [#allocation12], 4
      %s79 = int_to_ptr.vmem [resolvable:$true] %s78
      %84 = dma.hbm_to_vmem [thread:$0]  %s5, 16384, %s79, [#allocation13], 128, 128, 8
    $region25: #{tpu_custom_call.1} parent=1 // pred_fallthru
      _
    // Predicated region
    $region26: #{tpu_custom_call.1} parent=1 // pred_check
      _
    $region27: #{tpu_custom_call.1} parent=1 // pred_check_branch
      %86 = sbr.rel (0) target = $region29
    $region28: #{tpu_custom_call.1} parent=1 // pred_region
      %s88 = ssub.s32 16, 16
      %89 = vsyncadd [#allocation13], %s88
      %s91 = sshll.u32 [#allocation14], 4
      %s92 = int_to_ptr.vmem [resolvable:$true] %s91
      %94 = dma.hbm_to_vmem [thread:$0]  %s6, 16, %s92, [#allocation13]
    $region29: #{tpu_custom_call.1} parent=1 // pred_fallthru
      _
    // Predicated region
    $region30: #{tpu_custom_call.1} parent=1 // pred_check
      _
    $region31: #{tpu_custom_call.1} parent=1 // pred_check_branch
      %96 = sbr.rel (0) target = $region33
    $region32: #{tpu_custom_call.1} parent=1 // pred_region
      %s98 = ssub.s32 32, 32
      %99 = vsyncadd [#allocation16], %s98
      %s101 = sshll.u32 [#allocation15], 4
      %s102 = int_to_ptr.vmem [resolvable:$true] %s101
      %104 = dma.hbm_to_vmem [thread:$0]  %s7, 32, %s102, [#allocation16]
    $region33: #{tpu_custom_call.1} parent=1 // pred_fallthru
      _
    // Predicated region
    $region34: #{tpu_custom_call.1} parent=1 // pred_check
      _
    $region35: #{tpu_custom_call.1} parent=1 // pred_check_branch
      %106 = sbr.rel (0) target = $region37
    $region36: #{tpu_custom_call.1} parent=1 // pred_region
      %107 = dma.done [#allocation4], 32
    $region37: #{tpu_custom_call.1} parent=1 // pred_fallthru
      _
    // Predicated region
    $region38: #{tpu_custom_call.1} parent=1 // pred_check
      _
    $region39: #{tpu_custom_call.1} parent=1 // pred_check_branch
      %109 = sbr.rel (0) target = $region41
    $region40: #{tpu_custom_call.1} parent=1 // pred_region
      %110 = dma.done [#allocation7], 2048
    $region41: #{tpu_custom_call.1} parent=1 // pred_fallthru
      _
    // Predicated region
    $region42: #{tpu_custom_call.1} parent=1 // pred_check
      _
    $region43: #{tpu_custom_call.1} parent=1 // pred_check_branch
      %112 = sbr.rel (0) target = $region45
    $region44: #{tpu_custom_call.1} parent=1 // pred_region
      %113 = dma.done [#allocation7], 64
    $region45: #{tpu_custom_call.1} parent=1 // pred_fallthru
      _
    // Predicated region
    $region46: #{tpu_custom_call.1} parent=1 // pred_check
      _
    $region47: #{tpu_custom_call.1} parent=1 // pred_check_branch
      %115 = sbr.rel (0) target = $region49
    $region48: #{tpu_custom_call.1} parent=1 // pred_region
      %116 = dma.done [#allocation10], 65536
    $region49: #{tpu_custom_call.1} parent=1 // pred_fallthru
      _
    // Predicated region
    $region50: #{tpu_custom_call.1} parent=1 // pred_check
      _
    $region51: #{tpu_custom_call.1} parent=1 // pred_check_branch
      %118 = sbr.rel (0) target = $region53
    $region52: #{tpu_custom_call.1} parent=1 // pred_region
      %119 = dma.done [#allocation10], 128
    $region53: #{tpu_custom_call.1} parent=1 // pred_fallthru
      _
    // Predicated region
    $region54: #{tpu_custom_call.1} parent=1 // pred_check
      _
    $region55: #{tpu_custom_call.1} parent=1 // pred_check_branch
      %121 = sbr.rel (0) target = $region57
    $region56: #{tpu_custom_call.1} parent=1 // pred_region
      %122 = dma.done [#allocation13], 16384
    $region57: #{tpu_custom_call.1} parent=1 // pred_fallthru
      _
    // Predicated region
    $region58: #{tpu_custom_call.1} parent=1 // pred_check
      _
    $region59: #{tpu_custom_call.1} parent=1 // pred_check_branch
      %124 = sbr.rel (0) target = $region61
    $region60: #{tpu_custom_call.1} parent=1 // pred_region
      %125 = dma.done [#allocation13], 16
    $region61: #{tpu_custom_call.1} parent=1 // pred_fallthru
      _
    // Predicated region
    $region62: #{tpu_custom_call.1} parent=1 // pred_check
      _
    $region63: #{tpu_custom_call.1} parent=1 // pred_check_branch
      %127 = sbr.rel (0) target = $region65
    $region64: #{tpu_custom_call.1} parent=1 // pred_region
      %128 = dma.done [#allocation16], 32
    $region65: #{tpu_custom_call.1} parent=1 // pred_fallthru
      _
    %p129 = scmp.eq.s32.totalorder 0, 0
    // Predicated region
    $region66: #{tpu_custom_call.1} parent=1 // pred_check
      %p130 = pneg %p129
    $region67: #{tpu_custom_call.1} parent=1 // pred_check_branch
      %132 = sbr.rel (%p130) target = $region69
    $region68: #{tpu_custom_call.1} parent=1 // pred_region
      %v133 = vld [vmem:[#allocation6] sm:$0xff]
      %v134 = vld [vmem:[#allocation6 + $0x8] sm:$0xff]
      %v135 = vld [vmem:[#allocation6 + $0x10] sm:$0xff]
      %v136 = vld [vmem:[#allocation6 + $0x18] sm:$0xff]
      %v137 = vld [vmem:[#allocation6 + $0x20] sm:$0xff]
      %v138 = vld [vmem:[#allocation6 + $0x28] sm:$0xff]
      %v139 = vld [vmem:[#allocation6 + $0x30] sm:$0xff]
      %v140 = vld [vmem:[#allocation6 + $0x38] sm:$0xff]
      %v141 = vld [vmem:[#allocation6 + $0x40] sm:$0xff]
      %v142 = vld [vmem:[#allocation6 + $0x48] sm:$0xff]
      %v143 = vld [vmem:[#allocation6 + $0x50] sm:$0xff]
      %v144 = vld [vmem:[#allocation6 + $0x58] sm:$0xff]
      %v145 = vld [vmem:[#allocation6 + $0x60] sm:$0xff]
      %v146 = vld [vmem:[#allocation6 + $0x68] sm:$0xff]
      %v147 = vld [vmem:[#allocation6 + $0x70] sm:$0xff]
      %v148 = vld [vmem:[#allocation6 + $0x78] sm:$0xff]
      %v149 = vld [vmem:[#allocation3] sm:$0x3]
      %v150 = vld [vmem:[#allocation8] sm:$0xf]
      %v152 = vlaneseq
      %v153 = vshrl.u32 %v152, 7
      %v154 = vsub.s32 0, %v153
      %v155 = vrot.slane %v150, %v154
      %v156 = vlaneseq
      %v157 = vshrl.u32 %v156, 7
      %v158 = vsub.s32 1, %v157
      %v159 = vrot.slane %v150, %v158
      %v160 = vlaneseq
      %v161 = vshrl.u32 %v160, 7
      %v162 = vsub.s32 2, %v161
      %v163 = vrot.slane %v150, %v162
      %v164 = vlaneseq
      %v165 = vshrl.u32 %v164, 7
      %v166 = vsub.s32 3, %v165
      %v167 = vrot.slane %v150, %v166
      %vm172 = vcmask 261120
      %v174 = vsel %vm172, %v149, 0
      %176 = vmatprep.subr.mxu0 %v134
      %177 = vmatpush1.msra.mxu0 %v133
      %178 = vmatprep.subr.mxu0 %v138
      %179 = vmatpush1.msra.mxu0 %v137
      %180 = vmatprep.subr.mxu0 %v142
      %181 = vmatpush1.msra.mxu0 %v141
      %182 = vmatprep.subr.mxu0 %v146
      %183 = vmatpush1.msra.mxu0 %v145
      %184 = vmatprep.subr.mxu0 0.0
      %185 = vmatpush1.msra.mxu0 0.0
      %186 = vmatprep.subr.mxu0 0.0
      %187 = vmatpush1.msra.mxu0 0.0
      %188 = vmatprep.subr.mxu0 0.0
      %189 = vmatpush1.msra.mxu0 0.0
      %190 = vmatprep.subr.mxu0 0.0
      %191 = vmatpush1.msra.mxu0 0.0
      %192 = vmatprep.subr.mxu0 0.0
      %193 = vmatpush1.msra.mxu0 0.0
      %194 = vmatprep.subr.mxu0 0.0
      %195 = vmatpush1.msra.mxu0 0.0
      %196 = vmatprep.subr.mxu0 0.0
      %197 = vmatpush1.msra.mxu0 0.0
      %198 = vmatprep.subr.mxu0 0.0
      %199 = vmatpush1.msra.mxu0 0.0
      %200 = vmatprep.subr.mxu0 0.0
      %201 = vmatpush1.msra.mxu0 0.0
      %202 = vmatprep.subr.mxu0 0.0
      %203 = vmatpush1.msra.mxu0 0.0
      %204 = vmatprep.subr.mxu0 0.0
      %205 = vmatpush1.msra.mxu0 0.0
      %206 = vmatprep.subr.mxu0 0.0
      %207 = vmatpush1.msra.mxu0 0.0
      %208 = vmatprep.subr.mxu0 0.0
      %209 = vmatpush1.msra.mxu0 0.0
      %210 = vmatprep.subr.mxu0 0.0
      %211 = vmatpush1.msra.mxu0 0.0
      %212 = vmatprep.subr.mxu0 0.0
      %213 = vmatpush1.msra.mxu0 0.0
      %214 = vmatprep.subr.mxu0 0.0
      %215 = vmatpush1.msra.mxu0 0.0
      %216 = vmatprep.subr.mxu0 0.0
      %217 = vmatpush1.msra.mxu0 0.0
      %218 = vmatprep.subr.mxu0 0.0
      %219 = vmatpush1.msra.mxu0 0.0
      %220 = vmatprep.subr.mxu0 0.0
      %221 = vmatpush1.msra.mxu0 0.0
      %222 = vmatprep.subr.mxu0 0.0
      %223 = vmatpush1.msra.mxu0 0.0
      %224 = vmatprep.subr.mxu0 0.0
      %225 = vmatpush1.msra.mxu0 0.0
      %226 = vmatprep.subr.mxu0 0.0
      %227 = vmatpush1.msra.mxu0 0.0
      %228 = vmatprep.subr.mxu0 0.0
      %229 = vmatpush1.msra.mxu0 0.0
      %230 = vmatprep.subr.mxu0 0.0
      %231 = vmatpush1.msra.mxu0 0.0
      %232 = vmatprep.subr.mxu0 0.0
      %233 = vmatpush1.msra.mxu0 0.0
      %234 = vmatprep.subr.mxu0 0.0
      %235 = vmatpush1.msra.mxu0 0.0
      %236 = vmatprep.subr.mxu0 0.0
      %237 = vmatpush1.msra.mxu0 0.0
      %238 = vmatprep.subr.mxu0 0.0
      %239 = vmatpush1.msra.mxu0 0.0
      %240 = vmatprep.mubr.f32.mxu0 0.0
      %241 = vmatmul.mubr.f32.gmra.mrb[0].mxu0 %v174
      %v242 = vpop.f32.mrb[0].mxu0
      %v243 = vadd.f32 %v155, %v242
      %v244 = vpop.f32.mrb[0].mxu0
      %v245 = vadd.f32 %v159, %v244
      %246 = vdwg.mxu0
      %247 = vmatprep.subr.mxu0 %v136
      %248 = vmatpush1.msra.mxu0 %v135
      %249 = vmatprep.subr.mxu0 %v140
      %250 = vmatpush1.msra.mxu0 %v139
      %251 = vmatprep.subr.mxu0 %v144
      %252 = vmatpush1.msra.mxu0 %v143
      %253 = vmatprep.subr.mxu0 %v148
      %254 = vmatpush1.msra.mxu0 %v147
      %255 = vmatprep.subr.mxu0 0.0
      %256 = vmatpush1.msra.mxu0 0.0
      %257 = vmatprep.subr.mxu0 0.0
      %258 = vmatpush1.msra.mxu0 0.0
      %259 = vmatprep.subr.mxu0 0.0
      %260 = vmatpush1.msra.mxu0 0.0
      %261 = vmatprep.subr.mxu0 0.0
      %262 = vmatpush1.msra.mxu0 0.0
      %263 = vmatprep.subr.mxu0 0.0
      %264 = vmatpush1.msra.mxu0 0.0
      %265 = vmatprep.subr.mxu0 0.0
      %266 = vmatpush1.msra.mxu0 0.0
      %267 = vmatprep.subr.mxu0 0.0
      %268 = vmatpush1.msra.mxu0 0.0
      %269 = vmatprep.subr.mxu0 0.0
      %270 = vmatpush1.msra.mxu0 0.0
      %271 = vmatprep.subr.mxu0 0.0
      %272 = vmatpush1.msra.mxu0 0.0
      %273 = vmatprep.subr.mxu0 0.0
      %274 = vmatpush1.msra.mxu0 0.0
      %275 = vmatprep.subr.mxu0 0.0
      %276 = vmatpush1.msra.mxu0 0.0
      %277 = vmatprep.subr.mxu0 0.0
      %278 = vmatpush1.msra.mxu0 0.0
      %279 = vmatprep.subr.mxu0 0.0
      %280 = vmatpush1.msra.mxu0 0.0
      %281 = vmatprep.subr.mxu0 0.0
      %282 = vmatpush1.msra.mxu0 0.0
      %283 = vmatprep.subr.mxu0 0.0
      %284 = vmatpush1.msra.mxu0 0.0
      %285 = vmatprep.subr.mxu0 0.0
      %286 = vmatpush1.msra.mxu0 0.0
      %287 = vmatprep.subr.mxu0 0.0
      %288 = vmatpush1.msra.mxu0 0.0
      %289 = vmatprep.subr.mxu0 0.0
      %290 = vmatpush1.msra.mxu0 0.0
      %291 = vmatprep.subr.mxu0 0.0
      %292 = vmatpush1.msra.mxu0 0.0
      %293 = vmatprep.subr.mxu0 0.0
      %294 = vmatpush1.msra.mxu0 0.0
      %295 = vmatprep.subr.mxu0 0.0
      %296 = vmatpush1.msra.mxu0 0.0
      %297 = vmatprep.subr.mxu0 0.0
      %298 = vmatpush1.msra.mxu0 0.0
      %299 = vmatprep.subr.mxu0 0.0
      %300 = vmatpush1.msra.mxu0 0.0
      %301 = vmatprep.subr.mxu0 0.0
      %302 = vmatpush1.msra.mxu0 0.0
      %303 = vmatprep.subr.mxu0 0.0
      %304 = vmatpush1.msra.mxu0 0.0
      %305 = vmatprep.subr.mxu0 0.0
      %306 = vmatpush1.msra.mxu0 0.0
      %307 = vmatprep.subr.mxu0 0.0
      %308 = vmatpush1.msra.mxu0 0.0
      %309 = vmatprep.subr.mxu0 0.0
      %310 = vmatpush1.msra.mxu0 0.0
      %311 = vmatprep.mubr.f32.mxu0 0.0
      %312 = vmatmul.mubr.f32.gmra.mrb[0].mxu0 %v174
      %v313 = vpop.f32.mrb[0].mxu0
      %v314 = vadd.f32 %v163, %v313
      %v315 = vpop.f32.mrb[0].mxu0
      %v316 = vadd.f32 %v167, %v315
      %317 = vdwg.mxu0
      %vm318 = vcmp.gt.f32.partialorder %v243, 0.0
      %vm319 = vcmp.gt.f32.partialorder %v245, 0.0
      %vm320 = vcmp.gt.f32.partialorder %v314, 0.0
      %vm321 = vcmp.gt.f32.partialorder %v316, 0.0
      %v322 = vmul.f32 %v243, 0.01
      %v323 = vmul.f32 %v245, 0.01
      %v324 = vmul.f32 %v314, 0.01
      %v325 = vmul.f32 %v316, 0.01
      %v326 = vsel %vm318, %v243, %v322
      %v327 = vsel %vm319, %v245, %v323
      %v328 = vsel %vm320, %v314, %v324
      %v329 = vsel %vm321, %v316, %v325
      %v330 = vld [vmem:[#allocation9] sm:$0xff]
      %v331 = vld [vmem:[#allocation9 + $0x8] sm:$0xff]
      %v332 = vld [vmem:[#allocation9 + $0x10] sm:$0xff]
      %v333 = vld [vmem:[#allocation9 + $0x18] sm:$0xff]
      %v334 = vld [vmem:[#allocation9 + $0x20] sm:$0xff]
      %v335 = vld [vmem:[#allocation9 + $0x28] sm:$0xff]
      %v336 = vld [vmem:[#allocation9 + $0x30] sm:$0xff]
      %v337 = vld [vmem:[#allocation9 + $0x38] sm:$0xff]
      %v338 = vld [vmem:[#allocation9 + $0x40] sm:$0xff]
      %v339 = vld [vmem:[#allocation9 + $0x48] sm:$0xff]
      %v340 = vld [vmem:[#allocation9 + $0x50] sm:$0xff]
      %v341 = vld [vmem:[#allocation9 + $0x58] sm:$0xff]
      %v342 = vld [vmem:[#allocation9 + $0x60] sm:$0xff]
      %v343 = vld [vmem:[#allocation9 + $0x68] sm:$0xff]
      %v344 = vld [vmem:[#allocation9 + $0x70] sm:$0xff]
      %v345 = vld [vmem:[#allocation9 + $0x78] sm:$0xff]
      %v346 = vld [vmem:[#allocation9 + $0x80] sm:$0xff]
      %v347 = vld [vmem:[#allocation9 + $0x88] sm:$0xff]
      %v348 = vld [vmem:[#allocation9 + $0x90] sm:$0xff]
      %v349 = vld [vmem:[#allocation9 + $0x98] sm:$0xff]
      %v350 = vld [vmem:[#allocation9 + $0xa0] sm:$0xff]
      %v351 = vld [vmem:[#allocation9 + $0xa8] sm:$0xff]
      %v352 = vld [vmem:[#allocation9 + $0xb0] sm:$0xff]
      %v353 = vld [vmem:[#allocation9 + $0xb8] sm:$0xff]
      %v354 = vld [vmem:[#allocation9 + $0xc0] sm:$0xff]
      %v355 = vld [vmem:[#allocation9 + $0xc8] sm:$0xff]
      %v356 = vld [vmem:[#allocation9 + $0xd0] sm:$0xff]
      %v357 = vld [vmem:[#allocation9 + $0xd8] sm:$0xff]
      %v358 = vld [vmem:[#allocation9 + $0xe0] sm:$0xff]
      %v359 = vld [vmem:[#allocation9 + $0xe8] sm:$0xff]
      %v360 = vld [vmem:[#allocation9 + $0xf0] sm:$0xff]
      %v361 = vld [vmem:[#allocation9 + $0xf8] sm:$0xff]
      %v362 = vld [vmem:[#allocation9 + $0x100] sm:$0xff]
      %v363 = vld [vmem:[#allocation9 + $0x108] sm:$0xff]
      %v364 = vld [vmem:[#allocation9 + $0x110] sm:$0xff]
      %v365 = vld [vmem:[#allocation9 + $0x118] sm:$0xff]
      %v366 = vld [vmem:[#allocation9 + $0x120] sm:$0xff]
      %v367 = vld [vmem:[#allocation9 + $0x128] sm:$0xff]
      %v368 = vld [vmem:[#allocation9 + $0x130] sm:$0xff]
      %v369 = vld [vmem:[#allocation9 + $0x138] sm:$0xff]
      %v370 = vld [vmem:[#allocation9 + $0x140] sm:$0xff]
      %v371 = vld [vmem:[#allocation9 + $0x148] sm:$0xff]
      %v372 = vld [vmem:[#allocation9 + $0x150] sm:$0xff]
      %v373 = vld [vmem:[#allocation9 + $0x158] sm:$0xff]
      %v374 = vld [vmem:[#allocation9 + $0x160] sm:$0xff]
      %v375 = vld [vmem:[#allocation9 + $0x168] sm:$0xff]
      %v376 = vld [vmem:[#allocation9 + $0x170] sm:$0xff]
      %v377 = vld [vmem:[#allocation9 + $0x178] sm:$0xff]
      %v378 = vld [vmem:[#allocation9 + $0x180] sm:$0xff]
      %v379 = vld [vmem:[#allocation9 + $0x188] sm:$0xff]
      %v380 = vld [vmem:[#allocation9 + $0x190] sm:$0xff]
      %v381 = vld [vmem:[#allocation9 + $0x198] sm:$0xff]
      %v382 = vld [vmem:[#allocation9 + $0x1a0] sm:$0xff]
      %v383 = vld [vmem:[#allocation9 + $0x1a8] sm:$0xff]
      %v384 = vld [vmem:[#allocation9 + $0x1b0] sm:$0xff]
      %v385 = vld [vmem:[#allocation9 + $0x1b8] sm:$0xff]
      %v386 = vld [vmem:[#allocation9 + $0x1c0] sm:$0xff]
      %v387 = vld [vmem:[#allocation9 + $0x1c8] sm:$0xff]
      %v388 = vld [vmem:[#allocation9 + $0x1d0] sm:$0xff]
      %v389 = vld [vmem:[#allocation9 + $0x1d8] sm:$0xff]
      %v390 = vld [vmem:[#allocation9 + $0x1e0] sm:$0xff]
      %v391 = vld [vmem:[#allocation9 + $0x1e8] sm:$0xff]
      %v392 = vld [vmem:[#allocation9 + $0x1f0] sm:$0xff]
      %v393 = vld [vmem:[#allocation9 + $0x1f8] sm:$0xff]
      %v394 = vld [vmem:[#allocation9 + $0x200] sm:$0xff]
      %v395 = vld [vmem:[#allocation9 + $0x208] sm:$0xff]
      %v396 = vld [vmem:[#allocation9 + $0x210] sm:$0xff]
      %v397 = vld [vmem:[#allocation9 + $0x218] sm:$0xff]
      %v398 = vld [vmem:[#allocation9 + $0x220] sm:$0xff]
      %v399 = vld [vmem:[#allocation9 + $0x228] sm:$0xff]
      %v400 = vld [vmem:[#allocation9 + $0x230] sm:$0xff]
      %v401 = vld [vmem:[#allocation9 + $0x238] sm:$0xff]
      %v402 = vld [vmem:[#allocation9 + $0x240] sm:$0xff]
      %v403 = vld [vmem:[#allocation9 + $0x248] sm:$0xff]
      %v404 = vld [vmem:[#allocation9 + $0x250] sm:$0xff]
      %v405 = vld [vmem:[#allocation9 + $0x258] sm:$0xff]
      %v406 = vld [vmem:[#allocation9 + $0x260] sm:$0xff]
      %v407 = vld [vmem:[#allocation9 + $0x268] sm:$0xff]
      %v408 = vld [vmem:[#allocation9 + $0x270] sm:$0xff]
      %v409 = vld [vmem:[#allocation9 + $0x278] sm:$0xff]
      %v410 = vld [vmem:[#allocation9 + $0x280] sm:$0xff]
      %v411 = vld [vmem:[#allocation9 + $0x288] sm:$0xff]
      %v412 = vld [vmem:[#allocation9 + $0x290] sm:$0xff]
      %v413 = vld [vmem:[#allocation9 + $0x298] sm:$0xff]
      %v414 = vld [vmem:[#allocation9 + $0x2a0] sm:$0xff]
      %v415 = vld [vmem:[#allocation9 + $0x2a8] sm:$0xff]
      %v416 = vld [vmem:[#allocation9 + $0x2b0] sm:$0xff]
      %v417 = vld [vmem:[#allocation9 + $0x2b8] sm:$0xff]
      %v418 = vld [vmem:[#allocation9 + $0x2c0] sm:$0xff]
      %v419 = vld [vmem:[#allocation9 + $0x2c8] sm:$0xff]
      %v420 = vld [vmem:[#allocation9 + $0x2d0] sm:$0xff]
      %v421 = vld [vmem:[#allocation9 + $0x2d8] sm:$0xff]
      %v422 = vld [vmem:[#allocation9 + $0x2e0] sm:$0xff]
      %v423 = vld [vmem:[#allocation9 + $0x2e8] sm:$0xff]
      %v424 = vld [vmem:[#allocation9 + $0x2f0] sm:$0xff]
      %v425 = vld [vmem:[#allocation9 + $0x2f8] sm:$0xff]
      %v426 = vld [vmem:[#allocation9 + $0x300] sm:$0xff]
      %v427 = vld [vmem:[#allocation9 + $0x308] sm:$0xff]
      %v428 = vld [vmem:[#allocation9 + $0x310] sm:$0xff]
      %v429 = vld [vmem:[#allocation9 + $0x318] sm:$0xff]
      %v430 = vld [vmem:[#allocation9 + $0x320] sm:$0xff]
      %v431 = vld [vmem:[#allocation9 + $0x328] sm:$0xff]
      %v432 = vld [vmem:[#allocation9 + $0x330] sm:$0xff]
      %v433 = vld [vmem:[#allocation9 + $0x338] sm:$0xff]
      %v434 = vld [vmem:[#allocation9 + $0x340] sm:$0xff]
      %v435 = vld [vmem:[#allocation9 + $0x348] sm:$0xff]
      %v436 = vld [vmem:[#allocation9 + $0x350] sm:$0xff]
      %v437 = vld [vmem:[#allocation9 + $0x358] sm:$0xff]
      %v438 = vld [vmem:[#allocation9 + $0x360] sm:$0xff]
      %v439 = vld [vmem:[#allocation9 + $0x368] sm:$0xff]
      %v440 = vld [vmem:[#allocation9 + $0x370] sm:$0xff]
      %v441 = vld [vmem:[#allocation9 + $0x378] sm:$0xff]
      %v442 = vld [vmem:[#allocation9 + $0x380] sm:$0xff]
      %v443 = vld [vmem:[#allocation9 + $0x388] sm:$0xff]
      %v444 = vld [vmem:[#allocation9 + $0x390] sm:$0xff]
      %v445 = vld [vmem:[#allocation9 + $0x398] sm:$0xff]
      %v446 = vld [vmem:[#allocation9 + $0x3a0] sm:$0xff]
      %v447 = vld [vmem:[#allocation9 + $0x3a8] sm:$0xff]
      %v448 = vld [vmem:[#allocation9 + $0x3b0] sm:$0xff]
      %v449 = vld [vmem:[#allocation9 + $0x3b8] sm:$0xff]
      %v450 = vld [vmem:[#allocation9 + $0x3c0] sm:$0xff]
      %v451 = vld [vmem:[#allocation9 + $0x3c8] sm:$0xff]
      %v452 = vld [vmem:[#allocation9 + $0x3d0] sm:$0xff]
      %v453 = vld [vmem:[#allocation9 + $0x3d8] sm:$0xff]
      %v454 = vld [vmem:[#allocation9 + $0x3e0] sm:$0xff]
      %v455 = vld [vmem:[#allocation9 + $0x3e8] sm:$0xff]
      %v456 = vld [vmem:[#allocation9 + $0x3f0] sm:$0xff]
      %v457 = vld [vmem:[#allocation9 + $0x3f8] sm:$0xff]
      %v458 = vld [vmem:[#allocation9 + $0x400] sm:$0xff]
      %v459 = vld [vmem:[#allocation9 + $0x408] sm:$0xff]
      %v460 = vld [vmem:[#allocation9 + $0x410] sm:$0xff]
      %v461 = vld [vmem:[#allocation9 + $0x418] sm:$0xff]
      %v462 = vld [vmem:[#allocation9 + $0x420] sm:$0xff]
      %v463 = vld [vmem:[#allocation9 + $0x428] sm:$0xff]
      %v464 = vld [vmem:[#allocation9 + $0x430] sm:$0xff]
      %v465 = vld [vmem:[#allocation9 + $0x438] sm:$0xff]
      %v466 = vld [vmem:[#allocation9 + $0x440] sm:$0xff]
      %v467 = vld [vmem:[#allocation9 + $0x448] sm:$0xff]
      %v468 = vld [vmem:[#allocation9 + $0x450] sm:$0xff]
      %v469 = vld [vmem:[#allocation9 + $0x458] sm:$0xff]
      %v470 = vld [vmem:[#allocation9 + $0x460] sm:$0xff]
      %v471 = vld [vmem:[#allocation9 + $0x468] sm:$0xff]
      %v472 = vld [vmem:[#allocation9 + $0x470] sm:$0xff]
      %v473 = vld [vmem:[#allocation9 + $0x478] sm:$0xff]
      %v474 = vld [vmem:[#allocation9 + $0x480] sm:$0xff]
      %v475 = vld [vmem:[#allocation9 + $0x488] sm:$0xff]
      %v476 = vld [vmem:[#allocation9 + $0x490] sm:$0xff]
      %v477 = vld [vmem:[#allocation9 + $0x498] sm:$0xff]
      %v478 = vld [vmem:[#allocation9 + $0x4a0] sm:$0xff]
      %v479 = vld [vmem:[#allocation9 + $0x4a8] sm:$0xff]
      %v480 = vld [vmem:[#allocation9 + $0x4b0] sm:$0xff]
      %v481 = vld [vmem:[#allocation9 + $0x4b8] sm:$0xff]
      %v482 = vld [vmem:[#allocation9 + $0x4c0] sm:$0xff]
      %v483 = vld [vmem:[#allocation9 + $0x4c8] sm:$0xff]
      %v484 = vld [vmem:[#allocation9 + $0x4d0] sm:$0xff]
      %v485 = vld [vmem:[#allocation9 + $0x4d8] sm:$0xff]
      %v486 = vld [vmem:[#allocation9 + $0x4e0] sm:$0xff]
      %v487 = vld [vmem:[#allocation9 + $0x4e8] sm:$0xff]
      %v488 = vld [vmem:[#allocation9 + $0x4f0] sm:$0xff]
      %v489 = vld [vmem:[#allocation9 + $0x4f8] sm:$0xff]
      %v490 = vld [vmem:[#allocation9 + $0x500] sm:$0xff]
      %v491 = vld [vmem:[#allocation9 + $0x508] sm:$0xff]
      %v492 = vld [vmem:[#allocation9 + $0x510] sm:$0xff]
      %v493 = vld [vmem:[#allocation9 + $0x518] sm:$0xff]
      %v494 = vld [vmem:[#allocation9 + $0x520] sm:$0xff]
      %v495 = vld [vmem:[#allocation9 + $0x528] sm:$0xff]
      %v496 = vld [vmem:[#allocation9 + $0x530] sm:$0xff]
      %v497 = vld [vmem:[#allocation9 + $0x538] sm:$0xff]
      %v498 = vld [vmem:[#allocation9 + $0x540] sm:$0xff]
      %v499 = vld [vmem:[#allocation9 + $0x548] sm:$0xff]
      %v500 = vld [vmem:[#allocation9 + $0x550] sm:$0xff]
      %v501 = vld [vmem:[#allocation9 + $0x558] sm:$0xff]
      %v502 = vld [vmem:[#allocation9 + $0x560] sm:$0xff]
      %v503 = vld [vmem:[#allocation9 + $0x568] sm:$0xff]
      %v504 = vld [vmem:[#allocation9 + $0x570] sm:$0xff]
      %v505 = vld [vmem:[#allocation9 + $0x578] sm:$0xff]
      %v506 = vld [vmem:[#allocation9 + $0x580] sm:$0xff]
      %v507 = vld [vmem:[#allocation9 + $0x588] sm:$0xff]
      %v508 = vld [vmem:[#allocation9 + $0x590] sm:$0xff]
      %v509 = vld [vmem:[#allocation9 + $0x598] sm:$0xff]
      %v510 = vld [vmem:[#allocation9 + $0x5a0] sm:$0xff]
      %v511 = vld [vmem:[#allocation9 + $0x5a8] sm:$0xff]
      %v512 = vld [vmem:[#allocation9 + $0x5b0] sm:$0xff]
      %v513 = vld [vmem:[#allocation9 + $0x5b8] sm:$0xff]
      %v514 = vld [vmem:[#allocation9 + $0x5c0] sm:$0xff]
      %v515 = vld [vmem:[#allocation9 + $0x5c8] sm:$0xff]
      %v516 = vld [vmem:[#allocation9 + $0x5d0] sm:$0xff]
      %v517 = vld [vmem:[#allocation9 + $0x5d8] sm:$0xff]
      %v518 = vld [vmem:[#allocation9 + $0x5e0] sm:$0xff]
      %v519 = vld [vmem:[#allocation9 + $0x5e8] sm:$0xff]
      %v520 = vld [vmem:[#allocation9 + $0x5f0] sm:$0xff]
      %v521 = vld [vmem:[#allocation9 + $0x5f8] sm:$0xff]
      %v522 = vld [vmem:[#allocation9 + $0x600] sm:$0xff]
      %v523 = vld [vmem:[#allocation9 + $0x608] sm:$0xff]
      %v524 = vld [vmem:[#allocation9 + $0x610] sm:$0xff]
      %v525 = vld [vmem:[#allocation9 + $0x618] sm:$0xff]
      %v526 = vld [vmem:[#allocation9 + $0x620] sm:$0xff]
      %v527 = vld [vmem:[#allocation9 + $0x628] sm:$0xff]
      %v528 = vld [vmem:[#allocation9 + $0x630] sm:$0xff]
      %v529 = vld [vmem:[#allocation9 + $0x638] sm:$0xff]
      %v530 = vld [vmem:[#allocation9 + $0x640] sm:$0xff]
      %v531 = vld [vmem:[#allocation9 + $0x648] sm:$0xff]
      %v532 = vld [vmem:[#allocation9 + $0x650] sm:$0xff]
      %v533 = vld [vmem:[#allocation9 + $0x658] sm:$0xff]
      %v534 = vld [vmem:[#allocation9 + $0x660] sm:$0xff]
      %v535 = vld [vmem:[#allocation9 + $0x668] sm:$0xff]
      %v536 = vld [vmem:[#allocation9 + $0x670] sm:$0xff]
      %v537 = vld [vmem:[#allocation9 + $0x678] sm:$0xff]
      %v538 = vld [vmem:[#allocation9 + $0x680] sm:$0xff]
      %v539 = vld [vmem:[#allocation9 + $0x688] sm:$0xff]
      %v540 = vld [vmem:[#allocation9 + $0x690] sm:$0xff]
      %v541 = vld [vmem:[#allocation9 + $0x698] sm:$0xff]
      %v542 = vld [vmem:[#allocation9 + $0x6a0] sm:$0xff]
      %v543 = vld [vmem:[#allocation9 + $0x6a8] sm:$0xff]
      %v544 = vld [vmem:[#allocation9 + $0x6b0] sm:$0xff]
      %v545 = vld [vmem:[#allocation9 + $0x6b8] sm:$0xff]
      %v546 = vld [vmem:[#allocation9 + $0x6c0] sm:$0xff]
      %v547 = vld [vmem:[#allocation9 + $0x6c8] sm:$0xff]
      %v548 = vld [vmem:[#allocation9 + $0x6d0] sm:$0xff]
      %v549 = vld [vmem:[#allocation9 + $0x6d8] sm:$0xff]
      %v550 = vld [vmem:[#allocation9 + $0x6e0] sm:$0xff]
      %v551 = vld [vmem:[#allocation9 + $0x6e8] sm:$0xff]
      %v552 = vld [vmem:[#allocation9 + $0x6f0] sm:$0xff]
      %v553 = vld [vmem:[#allocation9 + $0x6f8] sm:$0xff]
      %v554 = vld [vmem:[#allocation9 + $0x700] sm:$0xff]
      %v555 = vld [vmem:[#allocation9 + $0x708] sm:$0xff]
      %v556 = vld [vmem:[#allocation9 + $0x710] sm:$0xff]
      %v557 = vld [vmem:[#allocation9 + $0x718] sm:$0xff]
      %v558 = vld [vmem:[#allocation9 + $0x720] sm:$0xff]
      %v559 = vld [vmem:[#allocation9 + $0x728] sm:$0xff]
      %v560 = vld [vmem:[#allocation9 + $0x730] sm:$0xff]
      %v561 = vld [vmem:[#allocation9 + $0x738] sm:$0xff]
      %v562 = vld [vmem:[#allocation9 + $0x740] sm:$0xff]
      %v563 = vld [vmem:[#allocation9 + $0x748] sm:$0xff]
      %v564 = vld [vmem:[#allocation9 + $0x750] sm:$0xff]
      %v565 = vld [vmem:[#allocation9 + $0x758] sm:$0xff]
      %v566 = vld [vmem:[#allocation9 + $0x760] sm:$0xff]
      %v567 = vld [vmem:[#allocation9 + $0x768] sm:$0xff]
      %v568 = vld [vmem:[#allocation9 + $0x770] sm:$0xff]
      %v569 = vld [vmem:[#allocation9 + $0x778] sm:$0xff]
      %v570 = vld [vmem:[#allocation9 + $0x780] sm:$0xff]
      %v571 = vld [vmem:[#allocation9 + $0x788] sm:$0xff]
      %v572 = vld [vmem:[#allocation9 + $0x790] sm:$0xff]
      %v573 = vld [vmem:[#allocation9 + $0x798] sm:$0xff]
      %v574 = vld [vmem:[#allocation9 + $0x7a0] sm:$0xff]
      %v575 = vld [vmem:[#allocation9 + $0x7a8] sm:$0xff]
      %v576 = vld [vmem:[#allocation9 + $0x7b0] sm:$0xff]
      %v577 = vld [vmem:[#allocation9 + $0x7b8] sm:$0xff]
      %v578 = vld [vmem:[#allocation9 + $0x7c0] sm:$0xff]
      %v579 = vld [vmem:[#allocation9 + $0x7c8] sm:$0xff]
      %v580 = vld [vmem:[#allocation9 + $0x7d0] sm:$0xff]
      %v581 = vld [vmem:[#allocation9 + $0x7d8] sm:$0xff]
      %v582 = vld [vmem:[#allocation9 + $0x7e0] sm:$0xff]
      %v583 = vld [vmem:[#allocation9 + $0x7e8] sm:$0xff]
      %v584 = vld [vmem:[#allocation9 + $0x7f0] sm:$0xff]
      %v585 = vld [vmem:[#allocation9 + $0x7f8] sm:$0xff]
      %v586 = vld [vmem:[#allocation9 + $0x800] sm:$0xff]
      %v587 = vld [vmem:[#allocation9 + $0x808] sm:$0xff]
      %v588 = vld [vmem:[#allocation9 + $0x810] sm:$0xff]
      %v589 = vld [vmem:[#allocation9 + $0x818] sm:$0xff]
      %v590 = vld [vmem:[#allocation9 + $0x820] sm:$0xff]
      %v591 = vld [vmem:[#allocation9 + $0x828] sm:$0xff]
      %v592 = vld [vmem:[#allocation9 + $0x830] sm:$0xff]
      %v593 = vld [vmem:[#allocation9 + $0x838] sm:$0xff]
      %v594 = vld [vmem:[#allocation9 + $0x840] sm:$0xff]
      %v595 = vld [vmem:[#allocation9 + $0x848] sm:$0xff]
      %v596 = vld [vmem:[#allocation9 + $0x850] sm:$0xff]
      %v597 = vld [vmem:[#allocation9 + $0x858] sm:$0xff]
      %v598 = vld [vmem:[#allocation9 + $0x860] sm:$0xff]
      %v599 = vld [vmem:[#allocation9 + $0x868] sm:$0xff]
      %v600 = vld [vmem:[#allocation9 + $0x870] sm:$0xff]
      %v601 = vld [vmem:[#allocation9 + $0x878] sm:$0xff]
      %v602 = vld [vmem:[#allocation9 + $0x880] sm:$0xff]
      %v603 = vld [vmem:[#allocation9 + $0x888] sm:$0xff]
      %v604 = vld [vmem:[#allocation9 + $0x890] sm:$0xff]
      %v605 = vld [vmem:[#allocation9 + $0x898] sm:$0xff]
      %v606 = vld [vmem:[#allocation9 + $0x8a0] sm:$0xff]
      %v607 = vld [vmem:[#allocation9 + $0x8a8] sm:$0xff]
      %v608 = vld [vmem:[#allocation9 + $0x8b0] sm:$0xff]
      %v609 = vld [vmem:[#allocation9 + $0x8b8] sm:$0xff]
      %v610 = vld [vmem:[#allocation9 + $0x8c0] sm:$0xff]
      %v611 = vld [vmem:[#allocation9 + $0x8c8] sm:$0xff]
      %v612 = vld [vmem:[#allocation9 + $0x8d0] sm:$0xff]
      %v613 = vld [vmem:[#allocation9 + $0x8d8] sm:$0xff]
      %v614 = vld [vmem:[#allocation9 + $0x8e0] sm:$0xff]
      %v615 = vld [vmem:[#allocation9 + $0x8e8] sm:$0xff]
      %v616 = vld [vmem:[#allocation9 + $0x8f0] sm:$0xff]
      %v617 = vld [vmem:[#allocation9 + $0x8f8] sm:$0xff]
      %v618 = vld [vmem:[#allocation9 + $0x900] sm:$0xff]
      %v619 = vld [vmem:[#allocation9 + $0x908] sm:$0xff]
      %v620 = vld [vmem:[#allocation9 + $0x910] sm:$0xff]
      %v621 = vld [vmem:[#allocation9 + $0x918] sm:$0xff]
      %v622 = vld [vmem:[#allocation9 + $0x920] sm:$0xff]
      %v623 = vld [vmem:[#allocation9 + $0x928] sm:$0xff]
      %v624 = vld [vmem:[#allocation9 + $0x930] sm:$0xff]
      %v625 = vld [vmem:[#allocation9 + $0x938] sm:$0xff]
      %v626 = vld [vmem:[#allocation9 + $0x940] sm:$0xff]
      %v627 = vld [vmem:[#allocation9 + $0x948] sm:$0xff]
      %v628 = vld [vmem:[#allocation9 + $0x950] sm:$0xff]
      %v629 = vld [vmem:[#allocation9 + $0x958] sm:$0xff]
      %v630 = vld [vmem:[#allocation9 + $0x960] sm:$0xff]
      %v631 = vld [vmem:[#allocation9 + $0x968] sm:$0xff]
      %v632 = vld [vmem:[#allocation9 + $0x970] sm:$0xff]
      %v633 = vld [vmem:[#allocation9 + $0x978] sm:$0xff]
      %v634 = vld [vmem:[#allocation9 + $0x980] sm:$0xff]
      %v635 = vld [vmem:[#allocation9 + $0x988] sm:$0xff]
      %v636 = vld [vmem:[#allocation9 + $0x990] sm:$0xff]
      %v637 = vld [vmem:[#allocation9 + $0x998] sm:$0xff]
      %v638 = vld [vmem:[#allocation9 + $0x9a0] sm:$0xff]
      %v639 = vld [vmem:[#allocation9 + $0x9a8] sm:$0xff]
      %v640 = vld [vmem:[#allocation9 + $0x9b0] sm:$0xff]
      %v641 = vld [vmem:[#allocation9 + $0x9b8] sm:$0xff]
      %v642 = vld [vmem:[#allocation9 + $0x9c0] sm:$0xff]
      %v643 = vld [vmem:[#allocation9 + $0x9c8] sm:$0xff]
      %v644 = vld [vmem:[#allocation9 + $0x9d0] sm:$0xff]
      %v645 = vld [vmem:[#allocation9 + $0x9d8] sm:$0xff]
      %v646 = vld [vmem:[#allocation9 + $0x9e0] sm:$0xff]
      %v647 = vld [vmem:[#allocation9 + $0x9e8] sm:$0xff]
      %v648 = vld [vmem:[#allocation9 + $0x9f0] sm:$0xff]
      %v649 = vld [vmem:[#allocation9 + $0x9f8] sm:$0xff]
      %v650 = vld [vmem:[#allocation9 + $0xa00] sm:$0xff]
      %v651 = vld [vmem:[#allocation9 + $0xa08] sm:$0xff]
      %v652 = vld [vmem:[#allocation9 + $0xa10] sm:$0xff]
      %v653 = vld [vmem:[#allocation9 + $0xa18] sm:$0xff]
      %v654 = vld [vmem:[#allocation9 + $0xa20] sm:$0xff]
      %v655 = vld [vmem:[#allocation9 + $0xa28] sm:$0xff]
      %v656 = vld [vmem:[#allocation9 + $0xa30] sm:$0xff]
      %v657 = vld [vmem:[#allocation9 + $0xa38] sm:$0xff]
      %v658 = vld [vmem:[#allocation9 + $0xa40] sm:$0xff]
      %v659 = vld [vmem:[#allocation9 + $0xa48] sm:$0xff]
      %v660 = vld [vmem:[#allocation9 + $0xa50] sm:$0xff]
      %v661 = vld [vmem:[#allocation9 + $0xa58] sm:$0xff]
      %v662 = vld [vmem:[#allocation9 + $0xa60] sm:$0xff]
      %v663 = vld [vmem:[#allocation9 + $0xa68] sm:$0xff]
      %v664 = vld [vmem:[#allocation9 + $0xa70] sm:$0xff]
      %v665 = vld [vmem:[#allocation9 + $0xa78] sm:$0xff]
      %v666 = vld [vmem:[#allocation9 + $0xa80] sm:$0xff]
      %v667 = vld [vmem:[#allocation9 + $0xa88] sm:$0xff]
      %v668 = vld [vmem:[#allocation9 + $0xa90] sm:$0xff]
      %v669 = vld [vmem:[#allocation9 + $0xa98] sm:$0xff]
      %v670 = vld [vmem:[#allocation9 + $0xaa0] sm:$0xff]
      %v671 = vld [vmem:[#allocation9 + $0xaa8] sm:$0xff]
      %v672 = vld [vmem:[#allocation9 + $0xab0] sm:$0xff]
      %v673 = vld [vmem:[#allocation9 + $0xab8] sm:$0xff]
      %v674 = vld [vmem:[#allocation9 + $0xac0] sm:$0xff]
      %v675 = vld [vmem:[#allocation9 + $0xac8] sm:$0xff]
      %v676 = vld [vmem:[#allocation9 + $0xad0] sm:$0xff]
      %v677 = vld [vmem:[#allocation9 + $0xad8] sm:$0xff]
      %v678 = vld [vmem:[#allocation9 + $0xae0] sm:$0xff]
      %v679 = vld [vmem:[#allocation9 + $0xae8] sm:$0xff]
      %v680 = vld [vmem:[#allocation9 + $0xaf0] sm:$0xff]
      %v681 = vld [vmem:[#allocation9 + $0xaf8] sm:$0xff]
      %v682 = vld [vmem:[#allocation9 + $0xb00] sm:$0xff]
      %v683 = vld [vmem:[#allocation9 + $0xb08] sm:$0xff]
      %v684 = vld [vmem:[#allocation9 + $0xb10] sm:$0xff]
      %v685 = vld [vmem:[#allocation9 + $0xb18] sm:$0xff]
      %v686 = vld [vmem:[#allocation9 + $0xb20] sm:$0xff]
      %v687 = vld [vmem:[#allocation9 + $0xb28] sm:$0xff]
      %v688 = vld [vmem:[#allocation9 + $0xb30] sm:$0xff]
      %v689 = vld [vmem:[#allocation9 + $0xb38] sm:$0xff]
      %v690 = vld [vmem:[#allocation9 + $0xb40] sm:$0xff]
      %v691 = vld [vmem:[#allocation9 + $0xb48] sm:$0xff]
      %v692 = vld [vmem:[#allocation9 + $0xb50] sm:$0xff]
      %v693 = vld [vmem:[#allocation9 + $0xb58] sm:$0xff]
      %v694 = vld [vmem:[#allocation9 + $0xb60] sm:$0xff]
      %v695 = vld [vmem:[#allocation9 + $0xb68] sm:$0xff]
      %v696 = vld [vmem:[#allocation9 + $0xb70] sm:$0xff]
      %v697 = vld [vmem:[#allocation9 + $0xb78] sm:$0xff]
      %v698 = vld [vmem:[#allocation9 + $0xb80] sm:$0xff]
      %v699 = vld [vmem:[#allocation9 + $0xb88] sm:$0xff]
      %v700 = vld [vmem:[#allocation9 + $0xb90] sm:$0xff]
      %v701 = vld [vmem:[#allocation9 + $0xb98] sm:$0xff]
      %v702 = vld [vmem:[#allocation9 + $0xba0] sm:$0xff]
      %v703 = vld [vmem:[#allocation9 + $0xba8] sm:$0xff]
      %v704 = vld [vmem:[#allocation9 + $0xbb0] sm:$0xff]
      %v705 = vld [vmem:[#allocation9 + $0xbb8] sm:$0xff]
      %v706 = vld [vmem:[#allocation9 + $0xbc0] sm:$0xff]
      %v707 = vld [vmem:[#allocation9 + $0xbc8] sm:$0xff]
      %v708 = vld [vmem:[#allocation9 + $0xbd0] sm:$0xff]
      %v709 = vld [vmem:[#allocation9 + $0xbd8] sm:$0xff]
      %v710 = vld [vmem:[#allocation9 + $0xbe0] sm:$0xff]
      %v711 = vld [vmem:[#allocation9 + $0xbe8] sm:$0xff]
      %v712 = vld [vmem:[#allocation9 + $0xbf0] sm:$0xff]
      %v713 = vld [vmem:[#allocation9 + $0xbf8] sm:$0xff]
      %v714 = vld [vmem:[#allocation9 + $0xc00] sm:$0xff]
      %v715 = vld [vmem:[#allocation9 + $0xc08] sm:$0xff]
      %v716 = vld [vmem:[#allocation9 + $0xc10] sm:$0xff]
      %v717 = vld [vmem:[#allocation9 + $0xc18] sm:$0xff]
      %v718 = vld [vmem:[#allocation9 + $0xc20] sm:$0xff]
      %v719 = vld [vmem:[#allocation9 + $0xc28] sm:$0xff]
      %v720 = vld [vmem:[#allocation9 + $0xc30] sm:$0xff]
      %v721 = vld [vmem:[#allocation9 + $0xc38] sm:$0xff]
      %v722 = vld [vmem:[#allocation9 + $0xc40] sm:$0xff]
      %v723 = vld [vmem:[#allocation9 + $0xc48] sm:$0xff]
      %v724 = vld [vmem:[#allocation9 + $0xc50] sm:$0xff]
      %v725 = vld [vmem:[#allocation9 + $0xc58] sm:$0xff]
      %v726 = vld [vmem:[#allocation9 + $0xc60] sm:$0xff]
      %v727 = vld [vmem:[#allocation9 + $0xc68] sm:$0xff]
      %v728 = vld [vmem:[#allocation9 + $0xc70] sm:$0xff]
      %v729 = vld [vmem:[#allocation9 + $0xc78] sm:$0xff]
      %v730 = vld [vmem:[#allocation9 + $0xc80] sm:$0xff]
      %v731 = vld [vmem:[#allocation9 + $0xc88] sm:$0xff]
      %v732 = vld [vmem:[#allocation9 + $0xc90] sm:$0xff]
      %v733 = vld [vmem:[#allocation9 + $0xc98] sm:$0xff]
      %v734 = vld [vmem:[#allocation9 + $0xca0] sm:$0xff]
      %v735 = vld [vmem:[#allocation9 + $0xca8] sm:$0xff]
      %v736 = vld [vmem:[#allocation9 + $0xcb0] sm:$0xff]
      %v737 = vld [vmem:[#allocation9 + $0xcb8] sm:$0xff]
      %v738 = vld [vmem:[#allocation9 + $0xcc0] sm:$0xff]
      %v739 = vld [vmem:[#allocation9 + $0xcc8] sm:$0xff]
      %v740 = vld [vmem:[#allocation9 + $0xcd0] sm:$0xff]
      %v741 = vld [vmem:[#allocation9 + $0xcd8] sm:$0xff]
      %v742 = vld [vmem:[#allocation9 + $0xce0] sm:$0xff]
      %v743 = vld [vmem:[#allocation9 + $0xce8] sm:$0xff]
      %v744 = vld [vmem:[#allocation9 + $0xcf0] sm:$0xff]
      %v745 = vld [vmem:[#allocation9 + $0xcf8] sm:$0xff]
      %v746 = vld [vmem:[#allocation9 + $0xd00] sm:$0xff]
      %v747 = vld [vmem:[#allocation9 + $0xd08] sm:$0xff]
      %v748 = vld [vmem:[#allocation9 + $0xd10] sm:$0xff]
      %v749 = vld [vmem:[#allocation9 + $0xd18] sm:$0xff]
      %v750 = vld [vmem:[#allocation9 + $0xd20] sm:$0xff]
      %v751 = vld [vmem:[#allocation9 + $0xd28] sm:$0xff]
      %v752 = vld [vmem:[#allocation9 + $0xd30] sm:$0xff]
      %v753 = vld [vmem:[#allocation9 + $0xd38] sm:$0xff]
      %v754 = vld [vmem:[#allocation9 + $0xd40] sm:$0xff]
      %v755 = vld [vmem:[#allocation9 + $0xd48] sm:$0xff]
      %v756 = vld [vmem:[#allocation9 + $0xd50] sm:$0xff]
      %v757 = vld [vmem:[#allocation9 + $0xd58] sm:$0xff]
      %v758 = vld [vmem:[#allocation9 + $0xd60] sm:$0xff]
      %v759 = vld [vmem:[#allocation9 + $0xd68] sm:$0xff]
      %v760 = vld [vmem:[#allocation9 + $0xd70] sm:$0xff]
      %v761 = vld [vmem:[#allocation9 + $0xd78] sm:$0xff]
      %v762 = vld [vmem:[#allocation9 + $0xd80] sm:$0xff]
      %v763 = vld [vmem:[#allocation9 + $0xd88] sm:$0xff]
      %v764 = vld [vmem:[#allocation9 + $0xd90] sm:$0xff]
      %v765 = vld [vmem:[#allocation9 + $0xd98] sm:$0xff]
      %v766 = vld [vmem:[#allocation9 + $0xda0] sm:$0xff]
      %v767 = vld [vmem:[#allocation9 + $0xda8] sm:$0xff]
      %v768 = vld [vmem:[#allocation9 + $0xdb0] sm:$0xff]
      %v769 = vld [vmem:[#allocation9 + $0xdb8] sm:$0xff]
      %v770 = vld [vmem:[#allocation9 + $0xdc0] sm:$0xff]
      %v771 = vld [vmem:[#allocation9 + $0xdc8] sm:$0xff]
      %v772 = vld [vmem:[#allocation9 + $0xdd0] sm:$0xff]
      %v773 = vld [vmem:[#allocation9 + $0xdd8] sm:$0xff]
      %v774 = vld [vmem:[#allocation9 + $0xde0] sm:$0xff]
      %v775 = vld [vmem:[#allocation9 + $0xde8] sm:$0xff]
      %v776 = vld [vmem:[#allocation9 + $0xdf0] sm:$0xff]
      %v777 = vld [vmem:[#allocation9 + $0xdf8] sm:$0xff]
      %v778 = vld [vmem:[#allocation9 + $0xe00] sm:$0xff]
      %v779 = vld [vmem:[#allocation9 + $0xe08] sm:$0xff]
      %v780 = vld [vmem:[#allocation9 + $0xe10] sm:$0xff]
      %v781 = vld [vmem:[#allocation9 + $0xe18] sm:$0xff]
      %v782 = vld [vmem:[#allocation9 + $0xe20] sm:$0xff]
      %v783 = vld [vmem:[#allocation9 + $0xe28] sm:$0xff]
      %v784 = vld [vmem:[#allocation9 + $0xe30] sm:$0xff]
      %v785 = vld [vmem:[#allocation9 + $0xe38] sm:$0xff]
      %v786 = vld [vmem:[#allocation9 + $0xe40] sm:$0xff]
      %v787 = vld [vmem:[#allocation9 + $0xe48] sm:$0xff]
      %v788 = vld [vmem:[#allocation9 + $0xe50] sm:$0xff]
      %v789 = vld [vmem:[#allocation9 + $0xe58] sm:$0xff]
      %v790 = vld [vmem:[#allocation9 + $0xe60] sm:$0xff]
      %v791 = vld [vmem:[#allocation9 + $0xe68] sm:$0xff]
      %v792 = vld [vmem:[#allocation9 + $0xe70] sm:$0xff]
      %v793 = vld [vmem:[#allocation9 + $0xe78] sm:$0xff]
      %v794 = vld [vmem:[#allocation9 + $0xe80] sm:$0xff]
      %v795 = vld [vmem:[#allocation9 + $0xe88] sm:$0xff]
      %v796 = vld [vmem:[#allocation9 + $0xe90] sm:$0xff]
      %v797 = vld [vmem:[#allocation9 + $0xe98] sm:$0xff]
      %v798 = vld [vmem:[#allocation9 + $0xea0] sm:$0xff]
      %v799 = vld [vmem:[#allocation9 + $0xea8] sm:$0xff]
      %v800 = vld [vmem:[#allocation9 + $0xeb0] sm:$0xff]
      %v801 = vld [vmem:[#allocation9 + $0xeb8] sm:$0xff]
      %v802 = vld [vmem:[#allocation9 + $0xec0] sm:$0xff]
      %v803 = vld [vmem:[#allocation9 + $0xec8] sm:$0xff]
      %v804 = vld [vmem:[#allocation9 + $0xed0] sm:$0xff]
      %v805 = vld [vmem:[#allocation9 + $0xed8] sm:$0xff]
      %v806 = vld [vmem:[#allocation9 + $0xee0] sm:$0xff]
      %v807 = vld [vmem:[#allocation9 + $0xee8] sm:$0xff]
      %v808 = vld [vmem:[#allocation9 + $0xef0] sm:$0xff]
      %v809 = vld [vmem:[#allocation9 + $0xef8] sm:$0xff]
      %v810 = vld [vmem:[#allocation9 + $0xf00] sm:$0xff]
      %v811 = vld [vmem:[#allocation9 + $0xf08] sm:$0xff]
      %v812 = vld [vmem:[#allocation9 + $0xf10] sm:$0xff]
      %v813 = vld [vmem:[#allocation9 + $0xf18] sm:$0xff]
      %v814 = vld [vmem:[#allocation9 + $0xf20] sm:$0xff]
      %v815 = vld [vmem:[#allocation9 + $0xf28] sm:$0xff]
      %v816 = vld [vmem:[#allocation9 + $0xf30] sm:$0xff]
      %v817 = vld [vmem:[#allocation9 + $0xf38] sm:$0xff]
      %v818 = vld [vmem:[#allocation9 + $0xf40] sm:$0xff]
      %v819 = vld [vmem:[#allocation9 + $0xf48] sm:$0xff]
      %v820 = vld [vmem:[#allocation9 + $0xf50] sm:$0xff]
      %v821 = vld [vmem:[#allocation9 + $0xf58] sm:$0xff]
      %v822 = vld [vmem:[#allocation9 + $0xf60] sm:$0xff]
      %v823 = vld [vmem:[#allocation9 + $0xf68] sm:$0xff]
      %v824 = vld [vmem:[#allocation9 + $0xf70] sm:$0xff]
      %v825 = vld [vmem:[#allocation9 + $0xf78] sm:$0xff]
      %v826 = vld [vmem:[#allocation9 + $0xf80] sm:$0xff]
      %v827 = vld [vmem:[#allocation9 + $0xf88] sm:$0xff]
      %v828 = vld [vmem:[#allocation9 + $0xf90] sm:$0xff]
      %v829 = vld [vmem:[#allocation9 + $0xf98] sm:$0xff]
      %v830 = vld [vmem:[#allocation9 + $0xfa0] sm:$0xff]
      %v831 = vld [vmem:[#allocation9 + $0xfa8] sm:$0xff]
      %v832 = vld [vmem:[#allocation9 + $0xfb0] sm:$0xff]
      %v833 = vld [vmem:[#allocation9 + $0xfb8] sm:$0xff]
      %v834 = vld [vmem:[#allocation9 + $0xfc0] sm:$0xff]
      %v835 = vld [vmem:[#allocation9 + $0xfc8] sm:$0xff]
      %v836 = vld [vmem:[#allocation9 + $0xfd0] sm:$0xff]
      %v837 = vld [vmem:[#allocation9 + $0xfd8] sm:$0xff]
      %v838 = vld [vmem:[#allocation9 + $0xfe0] sm:$0xff]
      %v839 = vld [vmem:[#allocation9 + $0xfe8] sm:$0xff]
      %v840 = vld [vmem:[#allocation9 + $0xff0] sm:$0xff]
      %v841 = vld [vmem:[#allocation9 + $0xff8] sm:$0xff]
      %v842 = vld [vmem:[#allocation11] sm:$0xff]
      %v844 = vlaneseq
      %v845 = vshrl.u32 %v844, 7
      %v846 = vsub.s32 0, %v845
      %v847 = vrot.slane %v842, %v846
      %v848 = vlaneseq
      %v849 = vshrl.u32 %v848, 7
      %v850 = vsub.s32 1, %v849
      %v851 = vrot.slane %v842, %v850
      %v852 = vlaneseq
      %v853 = vshrl.u32 %v852, 7
      %v854 = vsub.s32 2, %v853
      %v855 = vrot.slane %v842, %v854
      %v856 = vlaneseq
      %v857 = vshrl.u32 %v856, 7
      %v858 = vsub.s32 3, %v857
      %v859 = vrot.slane %v842, %v858
      %v860 = vlaneseq
      %v861 = vshrl.u32 %v860, 7
      %v862 = vsub.s32 4, %v861
      %v863 = vrot.slane %v842, %v862
      %v864 = vlaneseq
      %v865 = vshrl.u32 %v864, 7
      %v866 = vsub.s32 5, %v865
      %v867 = vrot.slane %v842, %v866
      %v868 = vlaneseq
      %v869 = vshrl.u32 %v868, 7
      %v870 = vsub.s32 6, %v869
      %v871 = vrot.slane %v842, %v870
      %v872 = vlaneseq
      %v873 = vshrl.u32 %v872, 7
      %v874 = vsub.s32 7, %v873
      %v875 = vrot.slane %v842, %v874
      %884 = vmatprep.subr.mxu0 %v331
      %885 = vmatpush1.msra.mxu0 %v330
      %886 = vmatprep.subr.mxu0 %v339
      %887 = vmatpush1.msra.mxu0 %v338
      %888 = vmatprep.subr.mxu0 %v347
      %889 = vmatpush1.msra.mxu0 %v346
      %890 = vmatprep.subr.mxu0 %v355
      %891 = vmatpush1.msra.mxu0 %v354
      %892 = vmatprep.subr.mxu0 %v363
      %893 = vmatpush1.msra.mxu0 %v362
      %894 = vmatprep.subr.mxu0 %v371
      %895 = vmatpush1.msra.mxu0 %v370
      %896 = vmatprep.subr.mxu0 %v379
      %897 = vmatpush1.msra.mxu0 %v378
      %898 = vmatprep.subr.mxu0 %v387
      %899 = vmatpush1.msra.mxu0 %v386
      %900 = vmatprep.subr.mxu0 %v395
      %901 = vmatpush1.msra.mxu0 %v394
      %902 = vmatprep.subr.mxu0 %v403
      %903 = vmatpush1.msra.mxu0 %v402
      %904 = vmatprep.subr.mxu0 %v411
      %905 = vmatpush1.msra.mxu0 %v410
      %906 = vmatprep.subr.mxu0 %v419
      %907 = vmatpush1.msra.mxu0 %v418
      %908 = vmatprep.subr.mxu0 %v427
      %909 = vmatpush1.msra.mxu0 %v426
      %910 = vmatprep.subr.mxu0 %v435
      %911 = vmatpush1.msra.mxu0 %v434
      %912 = vmatprep.subr.mxu0 %v443
      %913 = vmatpush1.msra.mxu0 %v442
      %914 = vmatprep.subr.mxu0 %v451
      %915 = vmatpush1.msra.mxu0 %v450
      %916 = vmatprep.subr.mxu0 %v459
      %917 = vmatpush1.msra.mxu0 %v458
      %918 = vmatprep.subr.mxu0 %v467
      %919 = vmatpush1.msra.mxu0 %v466
      %920 = vmatprep.subr.mxu0 %v475
      %921 = vmatpush1.msra.mxu0 %v474
      %922 = vmatprep.subr.mxu0 %v483
      %923 = vmatpush1.msra.mxu0 %v482
      %924 = vmatprep.subr.mxu0 %v491
      %925 = vmatpush1.msra.mxu0 %v490
      %926 = vmatprep.subr.mxu0 %v499
      %927 = vmatpush1.msra.mxu0 %v498
      %928 = vmatprep.subr.mxu0 %v507
      %929 = vmatpush1.msra.mxu0 %v506
      %930 = vmatprep.subr.mxu0 %v515
      %931 = vmatpush1.msra.mxu0 %v514
      %932 = vmatprep.subr.mxu0 %v523
      %933 = vmatpush1.msra.mxu0 %v522
      %934 = vmatprep.subr.mxu0 %v531
      %935 = vmatpush1.msra.mxu0 %v530
      %936 = vmatprep.subr.mxu0 %v539
      %937 = vmatpush1.msra.mxu0 %v538
      %938 = vmatprep.subr.mxu0 %v547
      %939 = vmatpush1.msra.mxu0 %v546
      %940 = vmatprep.subr.mxu0 %v555
      %941 = vmatpush1.msra.mxu0 %v554
      %942 = vmatprep.subr.mxu0 %v563
      %943 = vmatpush1.msra.mxu0 %v562
      %944 = vmatprep.subr.mxu0 %v571
      %945 = vmatpush1.msra.mxu0 %v570
      %946 = vmatprep.subr.mxu0 %v579
      %947 = vmatpush1.msra.mxu0 %v578
      %948 = vmatprep.mubr.f32.mxu0 %v327
      %949 = vmatmul.mubr.f32.gmra.mrb[0].mxu0 %v326
      %v950 = vpop.f32.mrb[0].mxu0
      %v951 = vadd.f32 %v847, %v950
      %v952 = vpop.f32.mrb[0].mxu0
      %v953 = vadd.f32 %v851, %v952
      %954 = vdwg.mxu0
      %955 = vmatprep.subr.mxu0 %v587
      %956 = vmatpush1.msra.mxu0 %v586
      %957 = vmatprep.subr.mxu0 %v595
      %958 = vmatpush1.msra.mxu0 %v594
      %959 = vmatprep.subr.mxu0 %v603
      %960 = vmatpush1.msra.mxu0 %v602
      %961 = vmatprep.subr.mxu0 %v611
      %962 = vmatpush1.msra.mxu0 %v610
      %963 = vmatprep.subr.mxu0 %v619
      %964 = vmatpush1.msra.mxu0 %v618
      %965 = vmatprep.subr.mxu0 %v627
      %966 = vmatpush1.msra.mxu0 %v626
      %967 = vmatprep.subr.mxu0 %v635
      %968 = vmatpush1.msra.mxu0 %v634
      %969 = vmatprep.subr.mxu0 %v643
      %970 = vmatpush1.msra.mxu0 %v642
      %971 = vmatprep.subr.mxu0 %v651
      %972 = vmatpush1.msra.mxu0 %v650
      %973 = vmatprep.subr.mxu0 %v659
      %974 = vmatpush1.msra.mxu0 %v658
      %975 = vmatprep.subr.mxu0 %v667
      %976 = vmatpush1.msra.mxu0 %v666
      %977 = vmatprep.subr.mxu0 %v675
      %978 = vmatpush1.msra.mxu0 %v674
      %979 = vmatprep.subr.mxu0 %v683
      %980 = vmatpush1.msra.mxu0 %v682
      %981 = vmatprep.subr.mxu0 %v691
      %982 = vmatpush1.msra.mxu0 %v690
      %983 = vmatprep.subr.mxu0 %v699
      %984 = vmatpush1.msra.mxu0 %v698
      %985 = vmatprep.subr.mxu0 %v707
      %986 = vmatpush1.msra.mxu0 %v706
      %987 = vmatprep.subr.mxu0 %v715
      %988 = vmatpush1.msra.mxu0 %v714
      %989 = vmatprep.subr.mxu0 %v723
      %990 = vmatpush1.msra.mxu0 %v722
      %991 = vmatprep.subr.mxu0 %v731
      %992 = vmatpush1.msra.mxu0 %v730
      %993 = vmatprep.subr.mxu0 %v739
      %994 = vmatpush1.msra.mxu0 %v738
      %995 = vmatprep.subr.mxu0 %v747
      %996 = vmatpush1.msra.mxu0 %v746
      %997 = vmatprep.subr.mxu0 %v755
      %998 = vmatpush1.msra.mxu0 %v754
      %999 = vmatprep.subr.mxu0 %v763
      %1000 = vmatpush1.msra.mxu0 %v762
      %1001 = vmatprep.subr.mxu0 %v771
      %1002 = vmatpush1.msra.mxu0 %v770
      %1003 = vmatprep.subr.mxu0 %v779
      %1004 = vmatpush1.msra.mxu0 %v778
      %1005 = vmatprep.subr.mxu0 %v787
      %1006 = vmatpush1.msra.mxu0 %v786
      %1007 = vmatprep.subr.mxu0 %v795
      %1008 = vmatpush1.msra.mxu0 %v794
      %1009 = vmatprep.subr.mxu0 %v803
      %1010 = vmatpush1.msra.mxu0 %v802
      %1011 = vmatprep.subr.mxu0 %v811
      %1012 = vmatpush1.msra.mxu0 %v810
      %1013 = vmatprep.subr.mxu0 %v819
      %1014 = vmatpush1.msra.mxu0 %v818
      %1015 = vmatprep.subr.mxu0 %v827
      %1016 = vmatpush1.msra.mxu0 %v826
      %1017 = vmatprep.subr.mxu0 %v835
      %1018 = vmatpush1.msra.mxu0 %v834
      %1019 = vmatprep.mubr.f32.mxu0 %v329
      %1020 = vmatmul.mubr.f32.gmra.mrb[0].mxu0 %v328
      %v1021 = vpop.f32.mrb[0].mxu0
      %v1022 = vadd.f32 %v951, %v1021
      %v1023 = vpop.f32.mrb[0].mxu0
      %v1024 = vadd.f32 %v953, %v1023
      %1025 = vdwg.mxu0
      %1026 = vmatprep.subr.mxu0 %v333
      %1027 = vmatpush1.msra.mxu0 %v332
      %1028 = vmatprep.subr.mxu0 %v341
      %1029 = vmatpush1.msra.mxu0 %v340
      %1030 = vmatprep.subr.mxu0 %v349
      %1031 = vmatpush1.msra.mxu0 %v348
      %1032 = vmatprep.subr.mxu0 %v357
      %1033 = vmatpush1.msra.mxu0 %v356
      %1034 = vmatprep.subr.mxu0 %v365
      %1035 = vmatpush1.msra.mxu0 %v364
      %1036 = vmatprep.subr.mxu0 %v373
      %1037 = vmatpush1.msra.mxu0 %v372
      %1038 = vmatprep.subr.mxu0 %v381
      %1039 = vmatpush1.msra.mxu0 %v380
      %1040 = vmatprep.subr.mxu0 %v389
      %1041 = vmatpush1.msra.mxu0 %v388
      %1042 = vmatprep.subr.mxu0 %v397
      %1043 = vmatpush1.msra.mxu0 %v396
      %1044 = vmatprep.subr.mxu0 %v405
      %1045 = vmatpush1.msra.mxu0 %v404
      %1046 = vmatprep.subr.mxu0 %v413
      %1047 = vmatpush1.msra.mxu0 %v412
      %1048 = vmatprep.subr.mxu0 %v421
      %1049 = vmatpush1.msra.mxu0 %v420
      %1050 = vmatprep.subr.mxu0 %v429
      %1051 = vmatpush1.msra.mxu0 %v428
      %1052 = vmatprep.subr.mxu0 %v437
      %1053 = vmatpush1.msra.mxu0 %v436
      %1054 = vmatprep.subr.mxu0 %v445
      %1055 = vmatpush1.msra.mxu0 %v444
      %1056 = vmatprep.subr.mxu0 %v453
      %1057 = vmatpush1.msra.mxu0 %v452
      %1058 = vmatprep.subr.mxu0 %v461
      %1059 = vmatpush1.msra.mxu0 %v460
      %1060 = vmatprep.subr.mxu0 %v469
      %1061 = vmatpush1.msra.mxu0 %v468
      %1062 = vmatprep.subr.mxu0 %v477
      %1063 = vmatpush1.msra.mxu0 %v476
      %1064 = vmatprep.subr.mxu0 %v485
      %1065 = vmatpush1.msra.mxu0 %v484
      %1066 = vmatprep.subr.mxu0 %v493
      %1067 = vmatpush1.msra.mxu0 %v492
      %1068 = vmatprep.subr.mxu0 %v501
      %1069 = vmatpush1.msra.mxu0 %v500
      %1070 = vmatprep.subr.mxu0 %v509
      %1071 = vmatpush1.msra.mxu0 %v508
      %1072 = vmatprep.subr.mxu0 %v517
      %1073 = vmatpush1.msra.mxu0 %v516
      %1074 = vmatprep.subr.mxu0 %v525
      %1075 = vmatpush1.msra.mxu0 %v524
      %1076 = vmatprep.subr.mxu0 %v533
      %1077 = vmatpush1.msra.mxu0 %v532
      %1078 = vmatprep.subr.mxu0 %v541
      %1079 = vmatpush1.msra.mxu0 %v540
      %1080 = vmatprep.subr.mxu0 %v549
      %1081 = vmatpush1.msra.mxu0 %v548
      %1082 = vmatprep.subr.mxu0 %v557
      %1083 = vmatpush1.msra.mxu0 %v556
      %1084 = vmatprep.subr.mxu0 %v565
      %1085 = vmatpush1.msra.mxu0 %v564
      %1086 = vmatprep.subr.mxu0 %v573
      %1087 = vmatpush1.msra.mxu0 %v572
      %1088 = vmatprep.subr.mxu0 %v581
      %1089 = vmatpush1.msra.mxu0 %v580
      %1090 = vmatprep.mubr.f32.mxu0 %v327
      %1091 = vmatmul.mubr.f32.gmra.mrb[0].mxu0 %v326
      %v1092 = vpop.f32.mrb[0].mxu0
      %v1093 = vadd.f32 %v855, %v1092
      %v1094 = vpop.f32.mrb[0].mxu0
      %v1095 = vadd.f32 %v859, %v1094
      %1096 = vdwg.mxu0
      %1097 = vmatprep.subr.mxu0 %v589
      %1098 = vmatpush1.msra.mxu0 %v588
      %1099 = vmatprep.subr.mxu0 %v597
      %1100 = vmatpush1.msra.mxu0 %v596
      %1101 = vmatprep.subr.mxu0 %v605
      %1102 = vmatpush1.msra.mxu0 %v604
      %1103 = vmatprep.subr.mxu0 %v613
      %1104 = vmatpush1.msra.mxu0 %v612
      %1105 = vmatprep.subr.mxu0 %v621
      %1106 = vmatpush1.msra.mxu0 %v620
      %1107 = vmatprep.subr.mxu0 %v629
      %1108 = vmatpush1.msra.mxu0 %v628
      %1109 = vmatprep.subr.mxu0 %v637
      %1110 = vmatpush1.msra.mxu0 %v636
      %1111 = vmatprep.subr.mxu0 %v645
      %1112 = vmatpush1.msra.mxu0 %v644
      %1113 = vmatprep.subr.mxu0 %v653
      %1114 = vmatpush1.msra.mxu0 %v652
      %1115 = vmatprep.subr.mxu0 %v661
      %1116 = vmatpush1.msra.mxu0 %v660
      %1117 = vmatprep.subr.mxu0 %v669
      %1118 = vmatpush1.msra.mxu0 %v668
      %1119 = vmatprep.subr.mxu0 %v677
      %1120 = vmatpush1.msra.mxu0 %v676
      %1121 = vmatprep.subr.mxu0 %v685
      %1122 = vmatpush1.msra.mxu0 %v684
      %1123 = vmatprep.subr.mxu0 %v693
      %1124 = vmatpush1.msra.mxu0 %v692
      %1125 = vmatprep.subr.mxu0 %v701
      %1126 = vmatpush1.msra.mxu0 %v700
      %1127 = vmatprep.subr.mxu0 %v709
      %1128 = vmatpush1.msra.mxu0 %v708
      %1129 = vmatprep.subr.mxu0 %v717
      %1130 = vmatpush1.msra.mxu0 %v716
      %1131 = vmatprep.subr.mxu0 %v725
      %1132 = vmatpush1.msra.mxu0 %v724
      %1133 = vmatprep.subr.mxu0 %v733
      %1134 = vmatpush1.msra.mxu0 %v732
      %1135 = vmatprep.subr.mxu0 %v741
      %1136 = vmatpush1.msra.mxu0 %v740
      %1137 = vmatprep.subr.mxu0 %v749
      %1138 = vmatpush1.msra.mxu0 %v748
      %1139 = vmatprep.subr.mxu0 %v757
      %1140 = vmatpush1.msra.mxu0 %v756
      %1141 = vmatprep.subr.mxu0 %v765
      %1142 = vmatpush1.msra.mxu0 %v764
      %1143 = vmatprep.subr.mxu0 %v773
      %1144 = vmatpush1.msra.mxu0 %v772
      %1145 = vmatprep.subr.mxu0 %v781
      %1146 = vmatpush1.msra.mxu0 %v780
      %1147 = vmatprep.subr.mxu0 %v789
      %1148 = vmatpush1.msra.mxu0 %v788
      %1149 = vmatprep.subr.mxu0 %v797
      %1150 = vmatpush1.msra.mxu0 %v796
      %1151 = vmatprep.subr.mxu0 %v805
      %1152 = vmatpush1.msra.mxu0 %v804
      %1153 = vmatprep.subr.mxu0 %v813
      %1154 = vmatpush1.msra.mxu0 %v812
      %1155 = vmatprep.subr.mxu0 %v821
      %1156 = vmatpush1.msra.mxu0 %v820
      %1157 = vmatprep.subr.mxu0 %v829
      %1158 = vmatpush1.msra.mxu0 %v828
      %1159 = vmatprep.subr.mxu0 %v837
      %1160 = vmatpush1.msra.mxu0 %v836
      %1161 = vmatprep.mubr.f32.mxu0 %v329
      %1162 = vmatmul.mubr.f32.gmra.mrb[0].mxu0 %v328
      %v1163 = vpop.f32.mrb[0].mxu0
      %v1164 = vadd.f32 %v1093, %v1163
      %v1165 = vpop.f32.mrb[0].mxu0
      %v1166 = vadd.f32 %v1095, %v1165
      %1167 = vdwg.mxu0
      %1168 = vmatprep.subr.mxu0 %v335
      %1169 = vmatpush1.msra.mxu0 %v334
      %1170 = vmatprep.subr.mxu0 %v343
      %1171 = vmatpush1.msra.mxu0 %v342
      %1172 = vmatprep.subr.mxu0 %v351
      %1173 = vmatpush1.msra.mxu0 %v350
      %1174 = vmatprep.subr.mxu0 %v359
      %1175 = vmatpush1.msra.mxu0 %v358
      %1176 = vmatprep.subr.mxu0 %v367
      %1177 = vmatpush1.msra.mxu0 %v366
      %1178 = vmatprep.subr.mxu0 %v375
      %1179 = vmatpush1.msra.mxu0 %v374
      %1180 = vmatprep.subr.mxu0 %v383
      %1181 = vmatpush1.msra.mxu0 %v382
      %1182 = vmatprep.subr.mxu0 %v391
      %1183 = vmatpush1.msra.mxu0 %v390
      %1184 = vmatprep.subr.mxu0 %v399
      %1185 = vmatpush1.msra.mxu0 %v398
      %1186 = vmatprep.subr.mxu0 %v407
      %1187 = vmatpush1.msra.mxu0 %v406
      %1188 = vmatprep.subr.mxu0 %v415
      %1189 = vmatpush1.msra.mxu0 %v414
      %1190 = vmatprep.subr.mxu0 %v423
      %1191 = vmatpush1.msra.mxu0 %v422
      %1192 = vmatprep.subr.mxu0 %v431
      %1193 = vmatpush1.msra.mxu0 %v430
      %1194 = vmatprep.subr.mxu0 %v439
      %1195 = vmatpush1.msra.mxu0 %v438
      %1196 = vmatprep.subr.mxu0 %v447
      %1197 = vmatpush1.msra.mxu0 %v446
      %1198 = vmatprep.subr.mxu0 %v455
      %1199 = vmatpush1.msra.mxu0 %v454
      %1200 = vmatprep.subr.mxu0 %v463
      %1201 = vmatpush1.msra.mxu0 %v462
      %1202 = vmatprep.subr.mxu0 %v471
      %1203 = vmatpush1.msra.mxu0 %v470
      %1204 = vmatprep.subr.mxu0 %v479
      %1205 = vmatpush1.msra.mxu0 %v478
      %1206 = vmatprep.subr.mxu0 %v487
      %1207 = vmatpush1.msra.mxu0 %v486
      %1208 = vmatprep.subr.mxu0 %v495
      %1209 = vmatpush1.msra.mxu0 %v494
      %1210 = vmatprep.subr.mxu0 %v503
      %1211 = vmatpush1.msra.mxu0 %v502
      %1212 = vmatprep.subr.mxu0 %v511
      %1213 = vmatpush1.msra.mxu0 %v510
      %1214 = vmatprep.subr.mxu0 %v519
      %1215 = vmatpush1.msra.mxu0 %v518
      %1216 = vmatprep.subr.mxu0 %v527
      %1217 = vmatpush1.msra.mxu0 %v526
      %1218 = vmatprep.subr.mxu0 %v535
      %1219 = vmatpush1.msra.mxu0 %v534
      %1220 = vmatprep.subr.mxu0 %v543
      %1221 = vmatpush1.msra.mxu0 %v542
      %1222 = vmatprep.subr.mxu0 %v551
      %1223 = vmatpush1.msra.mxu0 %v550
      %1224 = vmatprep.subr.mxu0 %v559
      %1225 = vmatpush1.msra.mxu0 %v558
      %1226 = vmatprep.subr.mxu0 %v567
      %1227 = vmatpush1.msra.mxu0 %v566
      %1228 = vmatprep.subr.mxu0 %v575
      %1229 = vmatpush1.msra.mxu0 %v574
      %1230 = vmatprep.subr.mxu0 %v583
      %1231 = vmatpush1.msra.mxu0 %v582
      %1232 = vmatprep.mubr.f32.mxu0 %v327
      %1233 = vmatmul.mubr.f32.gmra.mrb[0].mxu0 %v326
      %v1234 = vpop.f32.mrb[0].mxu0
      %v1235 = vadd.f32 %v863, %v1234
      %v1236 = vpop.f32.mrb[0].mxu0
      %v1237 = vadd.f32 %v867, %v1236
      %1238 = vdwg.mxu0
      %1239 = vmatprep.subr.mxu0 %v591
      %1240 = vmatpush1.msra.mxu0 %v590
      %1241 = vmatprep.subr.mxu0 %v599
      %1242 = vmatpush1.msra.mxu0 %v598
      %1243 = vmatprep.subr.mxu0 %v607
      %1244 = vmatpush1.msra.mxu0 %v606
      %1245 = vmatprep.subr.mxu0 %v615
      %1246 = vmatpush1.msra.mxu0 %v614
      %1247 = vmatprep.subr.mxu0 %v623
      %1248 = vmatpush1.msra.mxu0 %v622
      %1249 = vmatprep.subr.mxu0 %v631
      %1250 = vmatpush1.msra.mxu0 %v630
      %1251 = vmatprep.subr.mxu0 %v639
      %1252 = vmatpush1.msra.mxu0 %v638
      %1253 = vmatprep.subr.mxu0 %v647
      %1254 = vmatpush1.msra.mxu0 %v646
      %1255 = vmatprep.subr.mxu0 %v655
      %1256 = vmatpush1.msra.mxu0 %v654
      %1257 = vmatprep.subr.mxu0 %v663
      %1258 = vmatpush1.msra.mxu0 %v662
      %1259 = vmatprep.subr.mxu0 %v671
      %1260 = vmatpush1.msra.mxu0 %v670
      %1261 = vmatprep.subr.mxu0 %v679
      %1262 = vmatpush1.msra.mxu0 %v678
      %1263 = vmatprep.subr.mxu0 %v687
      %1264 = vmatpush1.msra.mxu0 %v686
      %1265 = vmatprep.subr.mxu0 %v695
      %1266 = vmatpush1.msra.mxu0 %v694
      %1267 = vmatprep.subr.mxu0 %v703
      %1268 = vmatpush1.msra.mxu0 %v702
      %1269 = vmatprep.subr.mxu0 %v711
      %1270 = vmatpush1.msra.mxu0 %v710
      %1271 = vmatprep.subr.mxu0 %v719
      %1272 = vmatpush1.msra.mxu0 %v718
      %1273 = vmatprep.subr.mxu0 %v727
      %1274 = vmatpush1.msra.mxu0 %v726
      %1275 = vmatprep.subr.mxu0 %v735
      %1276 = vmatpush1.msra.mxu0 %v734
      %1277 = vmatprep.subr.mxu0 %v743
      %1278 = vmatpush1.msra.mxu0 %v742
      %1279 = vmatprep.subr.mxu0 %v751
      %1280 = vmatpush1.msra.mxu0 %v750
      %1281 = vmatprep.subr.mxu0 %v759
      %1282 = vmatpush1.msra.mxu0 %v758
      %1283 = vmatprep.subr.mxu0 %v767
      %1284 = vmatpush1.msra.mxu0 %v766
      %1285 = vmatprep.subr.mxu0 %v775
      %1286 = vmatpush1.msra.mxu0 %v774
      %1287 = vmatprep.subr.mxu0 %v783
      %1288 = vmatpush1.msra.mxu0 %v782
      %1289 = vmatprep.subr.mxu0 %v791
      %1290 = vmatpush1.msra.mxu0 %v790
      %1291 = vmatprep.subr.mxu0 %v799
      %1292 = vmatpush1.msra.mxu0 %v798
      %1293 = vmatprep.subr.mxu0 %v807
      %1294 = vmatpush1.msra.mxu0 %v806
      %1295 = vmatprep.subr.mxu0 %v815
      %1296 = vmatpush1.msra.mxu0 %v814
      %1297 = vmatprep.subr.mxu0 %v823
      %1298 = vmatpush1.msra.mxu0 %v822
      %1299 = vmatprep.subr.mxu0 %v831
      %1300 = vmatpush1.msra.mxu0 %v830
      %1301 = vmatprep.subr.mxu0 %v839
      %1302 = vmatpush1.msra.mxu0 %v838
      %1303 = vmatprep.mubr.f32.mxu0 %v329
      %1304 = vmatmul.mubr.f32.gmra.mrb[0].mxu0 %v328
      %v1305 = vpop.f32.mrb[0].mxu0
      %v1306 = vadd.f32 %v1235, %v1305
      %v1307 = vpop.f32.mrb[0].mxu0
      %v1308 = vadd.f32 %v1237, %v1307
      %1309 = vdwg.mxu0
      %1310 = vmatprep.subr.mxu0 %v337
      %1311 = vmatpush1.msra.mxu0 %v336
      %1312 = vmatprep.subr.mxu0 %v345
      %1313 = vmatpush1.msra.mxu0 %v344
      %1314 = vmatprep.subr.mxu0 %v353
      %1315 = vmatpush1.msra.mxu0 %v352
      %1316 = vmatprep.subr.mxu0 %v361
      %1317 = vmatpush1.msra.mxu0 %v360
      %1318 = vmatprep.subr.mxu0 %v369
      %1319 = vmatpush1.msra.mxu0 %v368
      %1320 = vmatprep.subr.mxu0 %v377
      %1321 = vmatpush1.msra.mxu0 %v376
      %1322 = vmatprep.subr.mxu0 %v385
      %1323 = vmatpush1.msra.mxu0 %v384
      %1324 = vmatprep.subr.mxu0 %v393
      %1325 = vmatpush1.msra.mxu0 %v392
      %1326 = vmatprep.subr.mxu0 %v401
      %1327 = vmatpush1.msra.mxu0 %v400
      %1328 = vmatprep.subr.mxu0 %v409
      %1329 = vmatpush1.msra.mxu0 %v408
      %1330 = vmatprep.subr.mxu0 %v417
      %1331 = vmatpush1.msra.mxu0 %v416
      %1332 = vmatprep.subr.mxu0 %v425
      %1333 = vmatpush1.msra.mxu0 %v424
      %1334 = vmatprep.subr.mxu0 %v433
      %1335 = vmatpush1.msra.mxu0 %v432
      %1336 = vmatprep.subr.mxu0 %v441
      %1337 = vmatpush1.msra.mxu0 %v440
      %1338 = vmatprep.subr.mxu0 %v449
      %1339 = vmatpush1.msra.mxu0 %v448
      %1340 = vmatprep.subr.mxu0 %v457
      %1341 = vmatpush1.msra.mxu0 %v456
      %1342 = vmatprep.subr.mxu0 %v465
      %1343 = vmatpush1.msra.mxu0 %v464
      %1344 = vmatprep.subr.mxu0 %v473
      %1345 = vmatpush1.msra.mxu0 %v472
      %1346 = vmatprep.subr.mxu0 %v481
      %1347 = vmatpush1.msra.mxu0 %v480
      %1348 = vmatprep.subr.mxu0 %v489
      %1349 = vmatpush1.msra.mxu0 %v488
      %1350 = vmatprep.subr.mxu0 %v497
      %1351 = vmatpush1.msra.mxu0 %v496
      %1352 = vmatprep.subr.mxu0 %v505
      %1353 = vmatpush1.msra.mxu0 %v504
      %1354 = vmatprep.subr.mxu0 %v513
      %1355 = vmatpush1.msra.mxu0 %v512
      %1356 = vmatprep.subr.mxu0 %v521
      %1357 = vmatpush1.msra.mxu0 %v520
      %1358 = vmatprep.subr.mxu0 %v529
      %1359 = vmatpush1.msra.mxu0 %v528
      %1360 = vmatprep.subr.mxu0 %v537
      %1361 = vmatpush1.msra.mxu0 %v536
      %1362 = vmatprep.subr.mxu0 %v545
      %1363 = vmatpush1.msra.mxu0 %v544
      %1364 = vmatprep.subr.mxu0 %v553
      %1365 = vmatpush1.msra.mxu0 %v552
      %1366 = vmatprep.subr.mxu0 %v561
      %1367 = vmatpush1.msra.mxu0 %v560
      %1368 = vmatprep.subr.mxu0 %v569
      %1369 = vmatpush1.msra.mxu0 %v568
      %1370 = vmatprep.subr.mxu0 %v577
      %1371 = vmatpush1.msra.mxu0 %v576
      %1372 = vmatprep.subr.mxu0 %v585
      %1373 = vmatpush1.msra.mxu0 %v584
      %1374 = vmatprep.mubr.f32.mxu0 %v327
      %1375 = vmatmul.mubr.f32.gmra.mrb[0].mxu0 %v326
      %v1376 = vpop.f32.mrb[0].mxu0
      %v1377 = vadd.f32 %v871, %v1376
      %v1378 = vpop.f32.mrb[0].mxu0
      %v1379 = vadd.f32 %v875, %v1378
      %1380 = vdwg.mxu0
      %1381 = vmatprep.subr.mxu0 %v593
      %1382 = vmatpush1.msra.mxu0 %v592
      %1383 = vmatprep.subr.mxu0 %v601
      %1384 = vmatpush1.msra.mxu0 %v600
      %1385 = vmatprep.subr.mxu0 %v609
      %1386 = vmatpush1.msra.mxu0 %v608
      %1387 = vmatprep.subr.mxu0 %v617
      %1388 = vmatpush1.msra.mxu0 %v616
      %1389 = vmatprep.subr.mxu0 %v625
      %1390 = vmatpush1.msra.mxu0 %v624
      %1391 = vmatprep.subr.mxu0 %v633
      %1392 = vmatpush1.msra.mxu0 %v632
      %1393 = vmatprep.subr.mxu0 %v641
      %1394 = vmatpush1.msra.mxu0 %v640
      %1395 = vmatprep.subr.mxu0 %v649
      %1396 = vmatpush1.msra.mxu0 %v648
      %1397 = vmatprep.subr.mxu0 %v657
      %1398 = vmatpush1.msra.mxu0 %v656
      %1399 = vmatprep.subr.mxu0 %v665
      %1400 = vmatpush1.msra.mxu0 %v664
      %1401 = vmatprep.subr.mxu0 %v673
      %1402 = vmatpush1.msra.mxu0 %v672
      %1403 = vmatprep.subr.mxu0 %v681
      %1404 = vmatpush1.msra.mxu0 %v680
      %1405 = vmatprep.subr.mxu0 %v689
      %1406 = vmatpush1.msra.mxu0 %v688
      %1407 = vmatprep.subr.mxu0 %v697
      %1408 = vmatpush1.msra.mxu0 %v696
      %1409 = vmatprep.subr.mxu0 %v705
      %1410 = vmatpush1.msra.mxu0 %v704
      %1411 = vmatprep.subr.mxu0 %v713
      %1412 = vmatpush1.msra.mxu0 %v712
      %1413 = vmatprep.subr.mxu0 %v721
      %1414 = vmatpush1.msra.mxu0 %v720
      %1415 = vmatprep.subr.mxu0 %v729
      %1416 = vmatpush1.msra.mxu0 %v728
      %1417 = vmatprep.subr.mxu0 %v737
      %1418 = vmatpush1.msra.mxu0 %v736
      %1419 = vmatprep.subr.mxu0 %v745
      %1420 = vmatpush1.msra.mxu0 %v744
      %1421 = vmatprep.subr.mxu0 %v753
      %1422 = vmatpush1.msra.mxu0 %v752
      %1423 = vmatprep.subr.mxu0 %v761
      %1424 = vmatpush1.msra.mxu0 %v760
      %1425 = vmatprep.subr.mxu0 %v769
      %1426 = vmatpush1.msra.mxu0 %v768
      %1427 = vmatprep.subr.mxu0 %v777
      %1428 = vmatpush1.msra.mxu0 %v776
      %1429 = vmatprep.subr.mxu0 %v785
      %1430 = vmatpush1.msra.mxu0 %v784
      %1431 = vmatprep.subr.mxu0 %v793
      %1432 = vmatpush1.msra.mxu0 %v792
      %1433 = vmatprep.subr.mxu0 %v801
      %1434 = vmatpush1.msra.mxu0 %v800
      %1435 = vmatprep.subr.mxu0 %v809
      %1436 = vmatpush1.msra.mxu0 %v808
      %1437 = vmatprep.subr.mxu0 %v817
      %1438 = vmatpush1.msra.mxu0 %v816
      %1439 = vmatprep.subr.mxu0 %v825
      %1440 = vmatpush1.msra.mxu0 %v824
      %1441 = vmatprep.subr.mxu0 %v833
      %1442 = vmatpush1.msra.mxu0 %v832
      %1443 = vmatprep.subr.mxu0 %v841
      %1444 = vmatpush1.msra.mxu0 %v840
      %1445 = vmatprep.mubr.f32.mxu0 %v329
      %1446 = vmatmul.mubr.f32.gmra.mrb[0].mxu0 %v328
      %v1447 = vpop.f32.mrb[0].mxu0
      %v1448 = vadd.f32 %v1377, %v1447
      %v1449 = vpop.f32.mrb[0].mxu0
      %v1450 = vadd.f32 %v1379, %v1449
      %1451 = vdwg.mxu0
      %vm1452 = vcmp.gt.f32.partialorder %v1022, 0.0
      %vm1453 = vcmp.gt.f32.partialorder %v1024, 0.0
      %vm1454 = vcmp.gt.f32.partialorder %v1164, 0.0
      %vm1455 = vcmp.gt.f32.partialorder %v1166, 0.0
      %vm1456 = vcmp.gt.f32.partialorder %v1306, 0.0
      %vm1457 = vcmp.gt.f32.partialorder %v1308, 0.0
      %vm1458 = vcmp.gt.f32.partialorder %v1448, 0.0
      %vm1459 = vcmp.gt.f32.partialorder %v1450, 0.0
      %v1460 = vmul.f32 %v1022, 0.01
      %v1461 = vmul.f32 %v1024, 0.01
      %v1462 = vmul.f32 %v1164, 0.01
      %v1463 = vmul.f32 %v1166, 0.01
      %v1464 = vmul.f32 %v1306, 0.01
      %v1465 = vmul.f32 %v1308, 0.01
      %v1466 = vmul.f32 %v1448, 0.01
      %v1467 = vmul.f32 %v1450, 0.01
      %v1468 = vsel %vm1452, %v1022, %v1460
      %v1469 = vsel %vm1453, %v1024, %v1461
      %v1470 = vsel %vm1454, %v1164, %v1462
      %v1471 = vsel %vm1455, %v1166, %v1463
      %v1472 = vsel %vm1456, %v1306, %v1464
      %v1473 = vsel %vm1457, %v1308, %v1465
      %v1474 = vsel %vm1458, %v1448, %v1466
      %v1475 = vsel %vm1459, %v1450, %v1467
      %v1484 = vcombine.low %v1468, %v1469
      %v1485 = vcombine.low %v1470, %v1471
      %v1487 = vunpack.c.l.s4 1983009808
      %v1488 = vunpack.c.0.s8 %v1487
      %v1489 = vlaneseq
      %v1490 = vshrl.u32 %v1489, 7
      %v1491 = vsub.s32 %v1488, %v1490
      %v1492 = vrot.slane %v1484, %v1491
      %v1494 = vunpack.c.l.s4 1983009808
      %v1495 = vunpack.c.0.s8 %v1494
      %v1496 = vlaneseq
      %v1497 = vshrl.u32 %v1496, 7
      %v1498 = vsub.s32 %v1495, %v1497
      %v1499 = vrot.slane %v1485, %v1498
      %v1500 = vcombine.low %v1492, %v1499
      %v1501 = vcombine.low %v1472, %v1473
      %v1502 = vcombine.low %v1474, %v1475
      %v1504 = vunpack.c.l.s4 1983009808
      %v1505 = vunpack.c.0.s8 %v1504
      %v1506 = vlaneseq
      %v1507 = vshrl.u32 %v1506, 7
      %v1508 = vsub.s32 %v1505, %v1507
      %v1509 = vrot.slane %v1501, %v1508
      %v1511 = vunpack.c.l.s4 1983009808
      %v1512 = vunpack.c.0.s8 %v1511
      %v1513 = vlaneseq
      %v1514 = vshrl.u32 %v1513, 7
      %v1515 = vsub.s32 %v1512, %v1514
      %v1516 = vrot.slane %v1502, %v1515
      %v1517 = vcombine.low %v1509, %v1516
      %1520 = vst [vmem:[#allocation2] sm:$0xff] %v1500
      %1521 = vst [vmem:[#allocation2 + $0x8] sm:$0xff] %v1517
    $region69: #{tpu_custom_call.1} parent=1 // pred_fallthru
      _
    %v1522 = vld [vmem:[#allocation12] sm:$0xff]
    %v1523 = vld [vmem:[#allocation12 + $0x8] sm:$0xff]
    %v1524 = vld [vmem:[#allocation12 + $0x10] sm:$0xff]
    %v1525 = vld [vmem:[#allocation12 + $0x18] sm:$0xff]
    %v1526 = vld [vmem:[#allocation12 + $0x20] sm:$0xff]
    %v1527 = vld [vmem:[#allocation12 + $0x28] sm:$0xff]
    %v1528 = vld [vmem:[#allocation12 + $0x30] sm:$0xff]
    %v1529 = vld [vmem:[#allocation12 + $0x38] sm:$0xff]
    %v1530 = vld [vmem:[#allocation12 + $0x40] sm:$0xff]
    %v1531 = vld [vmem:[#allocation12 + $0x48] sm:$0xff]
    %v1532 = vld [vmem:[#allocation12 + $0x50] sm:$0xff]
    %v1533 = vld [vmem:[#allocation12 + $0x58] sm:$0xff]
    %v1534 = vld [vmem:[#allocation12 + $0x60] sm:$0xff]
    %v1535 = vld [vmem:[#allocation12 + $0x68] sm:$0xff]
    %v1536 = vld [vmem:[#allocation12 + $0x70] sm:$0xff]
    %v1537 = vld [vmem:[#allocation12 + $0x78] sm:$0xff]
    %v1538 = vld [vmem:[#allocation12 + $0x80] sm:$0xff]
    %v1539 = vld [vmem:[#allocation12 + $0x88] sm:$0xff]
    %v1540 = vld [vmem:[#allocation12 + $0x90] sm:$0xff]
    %v1541 = vld [vmem:[#allocation12 + $0x98] sm:$0xff]
    %v1542 = vld [vmem:[#allocation12 + $0xa0] sm:$0xff]
    %v1543 = vld [vmem:[#allocation12 + $0xa8] sm:$0xff]
    %v1544 = vld [vmem:[#allocation12 + $0xb0] sm:$0xff]
    %v1545 = vld [vmem:[#allocation12 + $0xb8] sm:$0xff]
    %v1546 = vld [vmem:[#allocation12 + $0xc0] sm:$0xff]
    %v1547 = vld [vmem:[#allocation12 + $0xc8] sm:$0xff]
    %v1548 = vld [vmem:[#allocation12 + $0xd0] sm:$0xff]
    %v1549 = vld [vmem:[#allocation12 + $0xd8] sm:$0xff]
    %v1550 = vld [vmem:[#allocation12 + $0xe0] sm:$0xff]
    %v1551 = vld [vmem:[#allocation12 + $0xe8] sm:$0xff]
    %v1552 = vld [vmem:[#allocation12 + $0xf0] sm:$0xff]
    %v1553 = vld [vmem:[#allocation12 + $0xf8] sm:$0xff]
    %v1554 = vld [vmem:[#allocation12 + $0x100] sm:$0xff]
    %v1555 = vld [vmem:[#allocation12 + $0x108] sm:$0xff]
    %v1556 = vld [vmem:[#allocation12 + $0x110] sm:$0xff]
    %v1557 = vld [vmem:[#allocation12 + $0x118] sm:$0xff]
    %v1558 = vld [vmem:[#allocation12 + $0x120] sm:$0xff]
    %v1559 = vld [vmem:[#allocation12 + $0x128] sm:$0xff]
    %v1560 = vld [vmem:[#allocation12 + $0x130] sm:$0xff]
    %v1561 = vld [vmem:[#allocation12 + $0x138] sm:$0xff]
    %v1562 = vld [vmem:[#allocation12 + $0x140] sm:$0xff]
    %v1563 = vld [vmem:[#allocation12 + $0x148] sm:$0xff]
    %v1564 = vld [vmem:[#allocation12 + $0x150] sm:$0xff]
    %v1565 = vld [vmem:[#allocation12 + $0x158] sm:$0xff]
    %v1566 = vld [vmem:[#allocation12 + $0x160] sm:$0xff]
    %v1567 = vld [vmem:[#allocation12 + $0x168] sm:$0xff]
    %v1568 = vld [vmem:[#allocation12 + $0x170] sm:$0xff]
    %v1569 = vld [vmem:[#allocation12 + $0x178] sm:$0xff]
    %v1570 = vld [vmem:[#allocation12 + $0x180] sm:$0xff]
    %v1571 = vld [vmem:[#allocation12 + $0x188] sm:$0xff]
    %v1572 = vld [vmem:[#allocation12 + $0x190] sm:$0xff]
    %v1573 = vld [vmem:[#allocation12 + $0x198] sm:$0xff]
    %v1574 = vld [vmem:[#allocation12 + $0x1a0] sm:$0xff]
    %v1575 = vld [vmem:[#allocation12 + $0x1a8] sm:$0xff]
    %v1576 = vld [vmem:[#allocation12 + $0x1b0] sm:$0xff]
    %v1577 = vld [vmem:[#allocation12 + $0x1b8] sm:$0xff]
    %v1578 = vld [vmem:[#allocation12 + $0x1c0] sm:$0xff]
    %v1579 = vld [vmem:[#allocation12 + $0x1c8] sm:$0xff]
    %v1580 = vld [vmem:[#allocation12 + $0x1d0] sm:$0xff]
    %v1581 = vld [vmem:[#allocation12 + $0x1d8] sm:$0xff]
    %v1582 = vld [vmem:[#allocation12 + $0x1e0] sm:$0xff]
    %v1583 = vld [vmem:[#allocation12 + $0x1e8] sm:$0xff]
    %v1584 = vld [vmem:[#allocation12 + $0x1f0] sm:$0xff]
    %v1585 = vld [vmem:[#allocation12 + $0x1f8] sm:$0xff]
    %v1586 = vld [vmem:[#allocation12 + $0x200] sm:$0xff]
    %v1587 = vld [vmem:[#allocation12 + $0x208] sm:$0xff]
    %v1588 = vld [vmem:[#allocation12 + $0x210] sm:$0xff]
    %v1589 = vld [vmem:[#allocation12 + $0x218] sm:$0xff]
    %v1590 = vld [vmem:[#allocation12 + $0x220] sm:$0xff]
    %v1591 = vld [vmem:[#allocation12 + $0x228] sm:$0xff]
    %v1592 = vld [vmem:[#allocation12 + $0x230] sm:$0xff]
    %v1593 = vld [vmem:[#allocation12 + $0x238] sm:$0xff]
    %v1594 = vld [vmem:[#allocation12 + $0x240] sm:$0xff]
    %v1595 = vld [vmem:[#allocation12 + $0x248] sm:$0xff]
    %v1596 = vld [vmem:[#allocation12 + $0x250] sm:$0xff]
    %v1597 = vld [vmem:[#allocation12 + $0x258] sm:$0xff]
    %v1598 = vld [vmem:[#allocation12 + $0x260] sm:$0xff]
    %v1599 = vld [vmem:[#allocation12 + $0x268] sm:$0xff]
    %v1600 = vld [vmem:[#allocation12 + $0x270] sm:$0xff]
    %v1601 = vld [vmem:[#allocation12 + $0x278] sm:$0xff]
    %v1602 = vld [vmem:[#allocation12 + $0x280] sm:$0xff]
    %v1603 = vld [vmem:[#allocation12 + $0x288] sm:$0xff]
    %v1604 = vld [vmem:[#allocation12 + $0x290] sm:$0xff]
    %v1605 = vld [vmem:[#allocation12 + $0x298] sm:$0xff]
    %v1606 = vld [vmem:[#allocation12 + $0x2a0] sm:$0xff]
    %v1607 = vld [vmem:[#allocation12 + $0x2a8] sm:$0xff]
    %v1608 = vld [vmem:[#allocation12 + $0x2b0] sm:$0xff]
    %v1609 = vld [vmem:[#allocation12 + $0x2b8] sm:$0xff]
    %v1610 = vld [vmem:[#allocation12 + $0x2c0] sm:$0xff]
    %v1611 = vld [vmem:[#allocation12 + $0x2c8] sm:$0xff]
    %v1612 = vld [vmem:[#allocation12 + $0x2d0] sm:$0xff]
    %v1613 = vld [vmem:[#allocation12 + $0x2d8] sm:$0xff]
    %v1614 = vld [vmem:[#allocation12 + $0x2e0] sm:$0xff]
    %v1615 = vld [vmem:[#allocation12 + $0x2e8] sm:$0xff]
    %v1616 = vld [vmem:[#allocation12 + $0x2f0] sm:$0xff]
    %v1617 = vld [vmem:[#allocation12 + $0x2f8] sm:$0xff]
    %v1618 = vld [vmem:[#allocation12 + $0x300] sm:$0xff]
    %v1619 = vld [vmem:[#allocation12 + $0x308] sm:$0xff]
    %v1620 = vld [vmem:[#allocation12 + $0x310] sm:$0xff]
    %v1621 = vld [vmem:[#allocation12 + $0x318] sm:$0xff]
    %v1622 = vld [vmem:[#allocation12 + $0x320] sm:$0xff]
    %v1623 = vld [vmem:[#allocation12 + $0x328] sm:$0xff]
    %v1624 = vld [vmem:[#allocation12 + $0x330] sm:$0xff]
    %v1625 = vld [vmem:[#allocation12 + $0x338] sm:$0xff]
    %v1626 = vld [vmem:[#allocation12 + $0x340] sm:$0xff]
    %v1627 = vld [vmem:[#allocation12 + $0x348] sm:$0xff]
    %v1628 = vld [vmem:[#allocation12 + $0x350] sm:$0xff]
    %v1629 = vld [vmem:[#allocation12 + $0x358] sm:$0xff]
    %v1630 = vld [vmem:[#allocation12 + $0x360] sm:$0xff]
    %v1631 = vld [vmem:[#allocation12 + $0x368] sm:$0xff]
    %v1632 = vld [vmem:[#allocation12 + $0x370] sm:$0xff]
    %v1633 = vld [vmem:[#allocation12 + $0x378] sm:$0xff]
    %v1634 = vld [vmem:[#allocation12 + $0x380] sm:$0xff]
    %v1635 = vld [vmem:[#allocation12 + $0x388] sm:$0xff]
    %v1636 = vld [vmem:[#allocation12 + $0x390] sm:$0xff]
    %v1637 = vld [vmem:[#allocation12 + $0x398] sm:$0xff]
    %v1638 = vld [vmem:[#allocation12 + $0x3a0] sm:$0xff]
    %v1639 = vld [vmem:[#allocation12 + $0x3a8] sm:$0xff]
    %v1640 = vld [vmem:[#allocation12 + $0x3b0] sm:$0xff]
    %v1641 = vld [vmem:[#allocation12 + $0x3b8] sm:$0xff]
    %v1642 = vld [vmem:[#allocation12 + $0x3c0] sm:$0xff]
    %v1643 = vld [vmem:[#allocation12 + $0x3c8] sm:$0xff]
    %v1644 = vld [vmem:[#allocation12 + $0x3d0] sm:$0xff]
    %v1645 = vld [vmem:[#allocation12 + $0x3d8] sm:$0xff]
    %v1646 = vld [vmem:[#allocation12 + $0x3e0] sm:$0xff]
    %v1647 = vld [vmem:[#allocation12 + $0x3e8] sm:$0xff]
    %v1648 = vld [vmem:[#allocation12 + $0x3f0] sm:$0xff]
    %v1649 = vld [vmem:[#allocation12 + $0x3f8] sm:$0xff]
    %v1650 = vld [vmem:[#allocation2] sm:$0xff]
    %v1651 = vld [vmem:[#allocation2 + $0x8] sm:$0xff]
    %v1652 = vld [vmem:[#allocation14] sm:$0x1]
    %v1654 = vlaneseq
    %v1655 = vshrl.u32 %v1654, 7
    %v1656 = vsub.s32 0, %v1655
    %v1657 = vrot.slane %v1652, %v1656
    %v1661 = vcombine.high %v1650, %v1650
    %v1663 = vunpack.c.l.s4 1983009808
    %v1664 = vunpack.c.0.s8 %v1663
    %v1665 = vlaneseq
    %v1666 = vshrl.u32 %v1665, 7
    %v1667 = vsub.s32 %v1664, %v1666
    %v1668 = vrot.slane %v1650, %v1667
    %v1670 = vunpack.c.l.s4 1983009808
    %v1671 = vunpack.c.0.s8 %v1670
    %v1672 = vlaneseq
    %v1673 = vshrl.u32 %v1672, 7
    %v1674 = vsub.s32 %v1671, %v1673
    %v1675 = vrot.slane %v1661, %v1674
    %v1676 = vcombine.high %v1668, %v1668
    %v1677 = vcombine.high %v1675, %v1675
    %v1678 = vcombine.high %v1651, %v1651
    %v1680 = vunpack.c.l.s4 1983009808
    %v1681 = vunpack.c.0.s8 %v1680
    %v1682 = vlaneseq
    %v1683 = vshrl.u32 %v1682, 7
    %v1684 = vsub.s32 %v1681, %v1683
    %v1685 = vrot.slane %v1651, %v1684
    %v1687 = vunpack.c.l.s4 1983009808
    %v1688 = vunpack.c.0.s8 %v1687
    %v1689 = vlaneseq
    %v1690 = vshrl.u32 %v1689, 7
    %v1691 = vsub.s32 %v1688, %v1690
    %v1692 = vrot.slane %v1678, %v1691
    %v1693 = vcombine.high %v1685, %v1685
    %v1694 = vcombine.high %v1692, %v1692
    %1703 = vmatprep.subr.mxu0 0.0
    %1704 = vmatpush1.msra.mxu0 %v1522
    %1705 = vmatprep.subr.mxu0 0.0
    %1706 = vmatpush1.msra.mxu0 %v1523
    %1707 = vmatprep.subr.mxu0 0.0
    %1708 = vmatpush1.msra.mxu0 %v1524
    %1709 = vmatprep.subr.mxu0 0.0
    %1710 = vmatpush1.msra.mxu0 %v1525
    %1711 = vmatprep.subr.mxu0 0.0
    %1712 = vmatpush1.msra.mxu0 %v1526
    %1713 = vmatprep.subr.mxu0 0.0
    %1714 = vmatpush1.msra.mxu0 %v1527
    %1715 = vmatprep.subr.mxu0 0.0
    %1716 = vmatpush1.msra.mxu0 %v1528
    %1717 = vmatprep.subr.mxu0 0.0
    %1718 = vmatpush1.msra.mxu0 %v1529
    %1719 = vmatprep.subr.mxu0 0.0
    %1720 = vmatpush1.msra.mxu0 %v1530
    %1721 = vmatprep.subr.mxu0 0.0
    %1722 = vmatpush1.msra.mxu0 %v1531
    %1723 = vmatprep.subr.mxu0 0.0
    %1724 = vmatpush1.msra.mxu0 %v1532
    %1725 = vmatprep.subr.mxu0 0.0
    %1726 = vmatpush1.msra.mxu0 %v1533
    %1727 = vmatprep.subr.mxu0 0.0
    %1728 = vmatpush1.msra.mxu0 %v1534
    %1729 = vmatprep.subr.mxu0 0.0
    %1730 = vmatpush1.msra.mxu0 %v1535
    %1731 = vmatprep.subr.mxu0 0.0
    %1732 = vmatpush1.msra.mxu0 %v1536
    %1733 = vmatprep.subr.mxu0 0.0
    %1734 = vmatpush1.msra.mxu0 %v1537
    %1735 = vmatprep.subr.mxu0 0.0
    %1736 = vmatpush1.msra.mxu0 %v1538
    %1737 = vmatprep.subr.mxu0 0.0
    %1738 = vmatpush1.msra.mxu0 %v1539
    %1739 = vmatprep.subr.mxu0 0.0
    %1740 = vmatpush1.msra.mxu0 %v1540
    %1741 = vmatprep.subr.mxu0 0.0
    %1742 = vmatpush1.msra.mxu0 %v1541
    %1743 = vmatprep.subr.mxu0 0.0
    %1744 = vmatpush1.msra.mxu0 %v1542
    %1745 = vmatprep.subr.mxu0 0.0
    %1746 = vmatpush1.msra.mxu0 %v1543
    %1747 = vmatprep.subr.mxu0 0.0
    %1748 = vmatpush1.msra.mxu0 %v1544
    %1749 = vmatprep.subr.mxu0 0.0
    %1750 = vmatpush1.msra.mxu0 %v1545
    %1751 = vmatprep.subr.mxu0 0.0
    %1752 = vmatpush1.msra.mxu0 %v1546
    %1753 = vmatprep.subr.mxu0 0.0
    %1754 = vmatpush1.msra.mxu0 %v1547
    %1755 = vmatprep.subr.mxu0 0.0
    %1756 = vmatpush1.msra.mxu0 %v1548
    %1757 = vmatprep.subr.mxu0 0.0
    %1758 = vmatpush1.msra.mxu0 %v1549
    %1759 = vmatprep.subr.mxu0 0.0
    %1760 = vmatpush1.msra.mxu0 %v1550
    %1761 = vmatprep.subr.mxu0 0.0
    %1762 = vmatpush1.msra.mxu0 %v1551
    %1763 = vmatprep.subr.mxu0 0.0
    %1764 = vmatpush1.msra.mxu0 %v1552
    %1765 = vmatprep.subr.mxu0 0.0
    %1766 = vmatpush1.msra.mxu0 %v1553
    %1767 = vmatprep.mubr.f32.mxu0 %v1676
    %1768 = vmatmul.mubr.f32.gmra.mrb[0].mxu0 %v1668
    %v1769 = vpop.f32.mrb[0].mxu0
    %v1770 = vadd.f32 %v1657, %v1769
    %v1771 = vpop.f32.mrb[0].mxu0
    %1772 = vdwg.mxu0
    %1773 = vmatprep.subr.mxu0 0.0
    %1774 = vmatpush1.msra.mxu0 %v1554
    %1775 = vmatprep.subr.mxu0 0.0
    %1776 = vmatpush1.msra.mxu0 %v1555
    %1777 = vmatprep.subr.mxu0 0.0
    %1778 = vmatpush1.msra.mxu0 %v1556
    %1779 = vmatprep.subr.mxu0 0.0
    %1780 = vmatpush1.msra.mxu0 %v1557
    %1781 = vmatprep.subr.mxu0 0.0
    %1782 = vmatpush1.msra.mxu0 %v1558
    %1783 = vmatprep.subr.mxu0 0.0
    %1784 = vmatpush1.msra.mxu0 %v1559
    %1785 = vmatprep.subr.mxu0 0.0
    %1786 = vmatpush1.msra.mxu0 %v1560
    %1787 = vmatprep.subr.mxu0 0.0
    %1788 = vmatpush1.msra.mxu0 %v1561
    %1789 = vmatprep.subr.mxu0 0.0
    %1790 = vmatpush1.msra.mxu0 %v1562
    %1791 = vmatprep.subr.mxu0 0.0
    %1792 = vmatpush1.msra.mxu0 %v1563
    %1793 = vmatprep.subr.mxu0 0.0
    %1794 = vmatpush1.msra.mxu0 %v1564
    %1795 = vmatprep.subr.mxu0 0.0
    %1796 = vmatpush1.msra.mxu0 %v1565
    %1797 = vmatprep.subr.mxu0 0.0
    %1798 = vmatpush1.msra.mxu0 %v1566
    %1799 = vmatprep.subr.mxu0 0.0
    %1800 = vmatpush1.msra.mxu0 %v1567
    %1801 = vmatprep.subr.mxu0 0.0
    %1802 = vmatpush1.msra.mxu0 %v1568
    %1803 = vmatprep.subr.mxu0 0.0
    %1804 = vmatpush1.msra.mxu0 %v1569
    %1805 = vmatprep.subr.mxu0 0.0
    %1806 = vmatpush1.msra.mxu0 %v1570
    %1807 = vmatprep.subr.mxu0 0.0
    %1808 = vmatpush1.msra.mxu0 %v1571
    %1809 = vmatprep.subr.mxu0 0.0
    %1810 = vmatpush1.msra.mxu0 %v1572
    %1811 = vmatprep.subr.mxu0 0.0
    %1812 = vmatpush1.msra.mxu0 %v1573
    %1813 = vmatprep.subr.mxu0 0.0
    %1814 = vmatpush1.msra.mxu0 %v1574
    %1815 = vmatprep.subr.mxu0 0.0
    %1816 = vmatpush1.msra.mxu0 %v1575
    %1817 = vmatprep.subr.mxu0 0.0
    %1818 = vmatpush1.msra.mxu0 %v1576
    %1819 = vmatprep.subr.mxu0 0.0
    %1820 = vmatpush1.msra.mxu0 %v1577
    %1821 = vmatprep.subr.mxu0 0.0
    %1822 = vmatpush1.msra.mxu0 %v1578
    %1823 = vmatprep.subr.mxu0 0.0
    %1824 = vmatpush1.msra.mxu0 %v1579
    %1825 = vmatprep.subr.mxu0 0.0
    %1826 = vmatpush1.msra.mxu0 %v1580
    %1827 = vmatprep.subr.mxu0 0.0
    %1828 = vmatpush1.msra.mxu0 %v1581
    %1829 = vmatprep.subr.mxu0 0.0
    %1830 = vmatpush1.msra.mxu0 %v1582
    %1831 = vmatprep.subr.mxu0 0.0
    %1832 = vmatpush1.msra.mxu0 %v1583
    %1833 = vmatprep.subr.mxu0 0.0
    %1834 = vmatpush1.msra.mxu0 %v1584
    %1835 = vmatprep.subr.mxu0 0.0
    %1836 = vmatpush1.msra.mxu0 %v1585
    %1837 = vmatprep.mubr.f32.mxu0 %v1677
    %1838 = vmatmul.mubr.f32.gmra.mrb[0].mxu0 %v1675
    %v1839 = vpop.f32.mrb[0].mxu0
    %v1840 = vadd.f32 %v1770, %v1839
    %v1841 = vpop.f32.mrb[0].mxu0
    %1842 = vdwg.mxu0
    %1843 = vmatprep.subr.mxu0 0.0
    %1844 = vmatpush1.msra.mxu0 %v1586
    %1845 = vmatprep.subr.mxu0 0.0
    %1846 = vmatpush1.msra.mxu0 %v1587
    %1847 = vmatprep.subr.mxu0 0.0
    %1848 = vmatpush1.msra.mxu0 %v1588
    %1849 = vmatprep.subr.mxu0 0.0
    %1850 = vmatpush1.msra.mxu0 %v1589
    %1851 = vmatprep.subr.mxu0 0.0
    %1852 = vmatpush1.msra.mxu0 %v1590
    %1853 = vmatprep.subr.mxu0 0.0
    %1854 = vmatpush1.msra.mxu0 %v1591
    %1855 = vmatprep.subr.mxu0 0.0
    %1856 = vmatpush1.msra.mxu0 %v1592
    %1857 = vmatprep.subr.mxu0 0.0
    %1858 = vmatpush1.msra.mxu0 %v1593
    %1859 = vmatprep.subr.mxu0 0.0
    %1860 = vmatpush1.msra.mxu0 %v1594
    %1861 = vmatprep.subr.mxu0 0.0
    %1862 = vmatpush1.msra.mxu0 %v1595
    %1863 = vmatprep.subr.mxu0 0.0
    %1864 = vmatpush1.msra.mxu0 %v1596
    %1865 = vmatprep.subr.mxu0 0.0
    %1866 = vmatpush1.msra.mxu0 %v1597
    %1867 = vmatprep.subr.mxu0 0.0
    %1868 = vmatpush1.msra.mxu0 %v1598
    %1869 = vmatprep.subr.mxu0 0.0
    %1870 = vmatpush1.msra.mxu0 %v1599
    %1871 = vmatprep.subr.mxu0 0.0
    %1872 = vmatpush1.msra.mxu0 %v1600
    %1873 = vmatprep.subr.mxu0 0.0
    %1874 = vmatpush1.msra.mxu0 %v1601
    %1875 = vmatprep.subr.mxu0 0.0
    %1876 = vmatpush1.msra.mxu0 %v1602
    %1877 = vmatprep.subr.mxu0 0.0
    %1878 = vmatpush1.msra.mxu0 %v1603
    %1879 = vmatprep.subr.mxu0 0.0
    %1880 = vmatpush1.msra.mxu0 %v1604
    %1881 = vmatprep.subr.mxu0 0.0
    %1882 = vmatpush1.msra.mxu0 %v1605
    %1883 = vmatprep.subr.mxu0 0.0
    %1884 = vmatpush1.msra.mxu0 %v1606
    %1885 = vmatprep.subr.mxu0 0.0
    %1886 = vmatpush1.msra.mxu0 %v1607
    %1887 = vmatprep.subr.mxu0 0.0
    %1888 = vmatpush1.msra.mxu0 %v1608
    %1889 = vmatprep.subr.mxu0 0.0
    %1890 = vmatpush1.msra.mxu0 %v1609
    %1891 = vmatprep.subr.mxu0 0.0
    %1892 = vmatpush1.msra.mxu0 %v1610
    %1893 = vmatprep.subr.mxu0 0.0
    %1894 = vmatpush1.msra.mxu0 %v1611
    %1895 = vmatprep.subr.mxu0 0.0
    %1896 = vmatpush1.msra.mxu0 %v1612
    %1897 = vmatprep.subr.mxu0 0.0
    %1898 = vmatpush1.msra.mxu0 %v1613
    %1899 = vmatprep.subr.mxu0 0.0
    %1900 = vmatpush1.msra.mxu0 %v1614
    %1901 = vmatprep.subr.mxu0 0.0
    %1902 = vmatpush1.msra.mxu0 %v1615
    %1903 = vmatprep.subr.mxu0 0.0
    %1904 = vmatpush1.msra.mxu0 %v1616
    %1905 = vmatprep.subr.mxu0 0.0
    %1906 = vmatpush1.msra.mxu0 %v1617
    %1907 = vmatprep.mubr.f32.mxu0 %v1693
    %1908 = vmatmul.mubr.f32.gmra.mrb[0].mxu0 %v1685
    %v1909 = vpop.f32.mrb[0].mxu0
    %v1910 = vadd.f32 %v1840, %v1909
    %v1911 = vpop.f32.mrb[0].mxu0
    %1912 = vdwg.mxu0
    %1913 = vmatprep.subr.mxu0 0.0
    %1914 = vmatpush1.msra.mxu0 %v1618
    %1915 = vmatprep.subr.mxu0 0.0
    %1916 = vmatpush1.msra.mxu0 %v1619
    %1917 = vmatprep.subr.mxu0 0.0
    %1918 = vmatpush1.msra.mxu0 %v1620
    %1919 = vmatprep.subr.mxu0 0.0
    %1920 = vmatpush1.msra.mxu0 %v1621
    %1921 = vmatprep.subr.mxu0 0.0
    %1922 = vmatpush1.msra.mxu0 %v1622
    %1923 = vmatprep.subr.mxu0 0.0
    %1924 = vmatpush1.msra.mxu0 %v1623
    %1925 = vmatprep.subr.mxu0 0.0
    %1926 = vmatpush1.msra.mxu0 %v1624
    %1927 = vmatprep.subr.mxu0 0.0
    %1928 = vmatpush1.msra.mxu0 %v1625
    %1929 = vmatprep.subr.mxu0 0.0
    %1930 = vmatpush1.msra.mxu0 %v1626
    %1931 = vmatprep.subr.mxu0 0.0
    %1932 = vmatpush1.msra.mxu0 %v1627
    %1933 = vmatprep.subr.mxu0 0.0
    %1934 = vmatpush1.msra.mxu0 %v1628
    %1935 = vmatprep.subr.mxu0 0.0
    %1936 = vmatpush1.msra.mxu0 %v1629
    %1937 = vmatprep.subr.mxu0 0.0
    %1938 = vmatpush1.msra.mxu0 %v1630
    %1939 = vmatprep.subr.mxu0 0.0
    %1940 = vmatpush1.msra.mxu0 %v1631
    %1941 = vmatprep.subr.mxu0 0.0
    %1942 = vmatpush1.msra.mxu0 %v1632
    %1943 = vmatprep.subr.mxu0 0.0
    %1944 = vmatpush1.msra.mxu0 %v1633
    %1945 = vmatprep.subr.mxu0 0.0
    %1946 = vmatpush1.msra.mxu0 %v1634
    %1947 = vmatprep.subr.mxu0 0.0
    %1948 = vmatpush1.msra.mxu0 %v1635
    %1949 = vmatprep.subr.mxu0 0.0
    %1950 = vmatpush1.msra.mxu0 %v1636
    %1951 = vmatprep.subr.mxu0 0.0
    %1952 = vmatpush1.msra.mxu0 %v1637
    %1953 = vmatprep.subr.mxu0 0.0
    %1954 = vmatpush1.msra.mxu0 %v1638
    %1955 = vmatprep.subr.mxu0 0.0
    %1956 = vmatpush1.msra.mxu0 %v1639
    %1957 = vmatprep.subr.mxu0 0.0
    %1958 = vmatpush1.msra.mxu0 %v1640
    %1959 = vmatprep.subr.mxu0 0.0
    %1960 = vmatpush1.msra.mxu0 %v1641
    %1961 = vmatprep.subr.mxu0 0.0
    %1962 = vmatpush1.msra.mxu0 %v1642
    %1963 = vmatprep.subr.mxu0 0.0
    %1964 = vmatpush1.msra.mxu0 %v1643
    %1965 = vmatprep.subr.mxu0 0.0
    %1966 = vmatpush1.msra.mxu0 %v1644
    %1967 = vmatprep.subr.mxu0 0.0
    %1968 = vmatpush1.msra.mxu0 %v1645
    %1969 = vmatprep.subr.mxu0 0.0
    %1970 = vmatpush1.msra.mxu0 %v1646
    %1971 = vmatprep.subr.mxu0 0.0
    %1972 = vmatpush1.msra.mxu0 %v1647
    %1973 = vmatprep.subr.mxu0 0.0
    %1974 = vmatpush1.msra.mxu0 %v1648
    %1975 = vmatprep.subr.mxu0 0.0
    %1976 = vmatpush1.msra.mxu0 %v1649
    %1977 = vmatprep.mubr.f32.mxu0 %v1694
    %1978 = vmatmul.mubr.f32.gmra.mrb[0].mxu0 %v1692
    %v1979 = vpop.f32.mrb[0].mxu0
    %v1980 = vadd.f32 %v1910, %v1979
    %v1981 = vpop.f32.mrb[0].mxu0
    %1982 = vdwg.mxu0
    %v1983 = vld [vmem:[#allocation15] sm:$0x3]
    %v1984 = vadd.f32 %v1980, %v1983
    %1985 = vst [vmem:[#allocation17] sm:$0x3] %v1984
    // Predicated region
    $region70: #{tpu_custom_call.1} parent=1 // pred_check
      _
    $region71: #{tpu_custom_call.1} parent=1 // pred_check_branch
      %1987 = sbr.rel (0) target = $region73
    $region72: #{tpu_custom_call.1} parent=1 // pred_region
      %s1989 = ssub.s32 32, 32
      %1990 = vsyncadd [#allocation5], %s1989
      %s1992 = sshll.u32 [#allocation17], 4
      %s1993 = int_to_ptr.vmem [resolvable:$true] %s1992
      %1995 = dma.vmem_to_hbm [thread:$0]  %s1993, 32, %s8, [#allocation5]
    $region73: #{tpu_custom_call.1} parent=1 // pred_fallthru
      _
    // Predicated region
    $region74: #{tpu_custom_call.1} parent=1 // pred_check
      _
    $region75: #{tpu_custom_call.1} parent=1 // pred_check_branch
      %1997 = sbr.rel (0) target = $region77
    $region76: #{tpu_custom_call.1} parent=1 // pred_region
      %1998 = dma.done [#allocation5], 32
    $region77: #{tpu_custom_call.1} parent=1 // pred_fallthru
      _
    %1999 = vsyncpa [#allocation4], 1
    %2000 = vsyncpa [#allocation7], 1
    %2001 = vsyncpa [#allocation10], 1
    %2002 = vsyncpa [#allocation13], 1
    %2003 = vsyncpa [#allocation16], 1
    %2004 = vsyncpa [#allocation5], 1

</llo_original>
